<compile_context>
chip_gen: v7x
topology: tpu7x:2x2x1
jax: 0.10.0
libtpu: 0.0.40
codegen_flags: <defaults>
</compile_context>

<pallas_src>
import functools

import jax
import jax.numpy as jnp
from jax import lax
from jax.experimental import pallas as pl
from jax.experimental.pallas import tpu as pltpu

LEAKY_SLOPE = 0.01   # F.leaky_relu default
BN_EPS = 1e-5        # nn.BatchNorm1d default
_ROW_ALIGN = 16      # sublane granularity safe for f32 and bf16 tiles


def _round_up(n, m):
    return ((n + m - 1) // m) * m


# ---------------------------------------------------------------------------
# Fused kernel: grid = (2, num_tiles), phase-major.
#   phase 0: z = x @ w1 per tile -> VMEM z cache + BN batch statistics
#   phase 1: folded BN + leaky_relu + fc3 + 2-class log_softmax from the cache
# ---------------------------------------------------------------------------
def _fused_kernel(x_ref, w1_ref, gamma_ref, beta_ref, w2_ref, b2_ref, o_ref,
                  z_buf, sum_ref, sumsq_ref, scale_ref, shift_ref,
                  *, num_tiles, rem, inv_n):
    phase = pl.program_id(0)
    i = pl.program_id(1)

    @pl.when(jnp.logical_and(phase == 0, i == 0))
    def _():
        sum_ref[...] = jnp.zeros_like(sum_ref)
        sumsq_ref[...] = jnp.zeros_like(sumsq_ref)

    @pl.when(phase == 0)
    def _phase0():
        z = jnp.dot(x_ref[...].astype(w1_ref.dtype), w1_ref[...],
                    preferred_element_type=jnp.float32)
        z_buf[i] = z                      # VMEM-resident; reused in phase 1

        def _accum(zt):
            sum_ref[...] += jnp.sum(zt, axis=0, keepdims=True)
            sumsq_ref[...] += jnp.sum(zt * zt, axis=0, keepdims=True)

        if rem == 0:
            _accum(z)
        else:
            # Only the last tile overruns the batch; x is NOT padded in the
            # wrapper so its out-of-bounds rows are garbage -> mask them out
            # of the statistics (mask only emitted on the last-tile branch).
            @pl.when(i < num_tiles - 1)
            def _():
                _accum(z)

            @pl.when(i == num_tiles - 1)
            def _():
                row = lax.broadcasted_iota(jnp.int32, (z.shape[0], 1), 0)
                _accum(jnp.where(row < rem, z, 0.0))

    @pl.when(phase == 1)
    def _phase1():
        @pl.when(i == 0)
        def _():
            mean = sum_ref[...] * inv_n
            var = jnp.maximum(sumsq_ref[...] * inv_n - mean * mean, 0.0)
            sc = gamma_ref[...] * lax.rsqrt(var + BN_EPS)
            scale_ref[...] = sc
            shift_ref[...] = beta_ref[...] - mean * sc

        z = z_buf[i]
        h = z * scale_ref[...] + shift_ref[...]       # folded BatchNorm
        a = jnp.maximum(h, LEAKY_SLOPE * h)           # leaky_relu (2 VALU ops)
        logits = jnp.dot(a.astype(w2_ref.dtype), w2_ref[...],
                         preferred_element_type=jnp.float32) + b2_ref[...]
        # 2-class log_softmax without a cross-lane reduce:
        #   lse = max(l0, l1) + log(1 + exp(-|l0 - l1|))
        l0 = logits[:, 0:1]
        l1 = logits[:, 1:2]
        lse = jnp.maximum(l0, l1) + jnp.log(1.0 + jnp.exp(-jnp.abs(l0 - l1)))
        o_ref[...] = logits - lse
        # Garbage rows of a partial last tile compute garbage here, but their
        # output writes fall outside (B, 2) and are dropped by the writeback.


# ---------------------------------------------------------------------------
# Fallback pass 1 (large B): per-feature batch statistics of z = x @ w1
# ---------------------------------------------------------------------------
def _stats_kernel(x_ref, w1_ref, sum_ref, sumsq_ref, *, num_tiles, rem):
    i = pl.program_id(0)

    @pl.when(i == 0)
    def _():
        sum_ref[...] = jnp.zeros_like(sum_ref)
        sumsq_ref[...] = jnp.zeros_like(sumsq_ref)

    z = jnp.dot(x_ref[...].astype(w1_ref.dtype), w1_ref[...],
                preferred_element_type=jnp.float32)

    def _accum(zt):
        sum_ref[...] += jnp.sum(zt, axis=0, keepdims=True)
        sumsq_ref[...] += jnp.sum(zt * zt, axis=0, keepdims=True)

    if rem == 0:
        _accum(z)
    else:
        @pl.when(i < num_tiles - 1)
        def _():
            _accum(z)

        @pl.when(i == num_tiles - 1)
        def _():
            row = lax.broadcasted_iota(jnp.int32, (z.shape[0], 1), 0)
            _accum(jnp.where(row < rem, z, 0.0))


# ---------------------------------------------------------------------------
# Fallback pass 2 (large B): recompute z, apply precomputed BN scale/shift,
# leaky_relu, fc3, log_softmax.
# ---------------------------------------------------------------------------
def _apply_kernel(x_ref, w1_ref, scale_ref, shift_ref, w2_ref, b2_ref, o_ref):
    z = jnp.dot(x_ref[...].astype(w1_ref.dtype), w1_ref[...],
                preferred_element_type=jnp.float32)
    h = z * scale_ref[...] + shift_ref[...]
    a = jnp.maximum(h, LEAKY_SLOPE * h)
    logits = jnp.dot(a.astype(w2_ref.dtype), w2_ref[...],
                     preferred_element_type=jnp.float32) + b2_ref[...]
    l0 = logits[:, 0:1]
    l1 = logits[:, 1:2]
    lse = jnp.maximum(l0, l1) + jnp.log(1.0 + jnp.exp(-jnp.abs(l0 - l1)))
    o_ref[...] = logits - lse


# ---------------------------------------------------------------------------
# Wrapper
# ---------------------------------------------------------------------------
def domain_discriminator(x, params, *, block_b=2048, matmul_dtype=jnp.bfloat16,
                         fused_z_budget_bytes=16 * 1024 * 1024):
    """x: (B, 256) f32 -> (B, 2) log-probabilities (training-mode BatchNorm)."""
    w1, b1, gamma, beta, w2, b2 = params
    del b1  # fc1 bias cancels exactly under training-mode BatchNorm.
    B, d_in = x.shape
    d_hid = w1.shape[1]
    d_out = w2.shape[1]

    TB = max(_ROW_ALIGN,
             min(_round_up(block_b, _ROW_ALIGN), _round_up(B, _ROW_ALIGN)))
    num_tiles = pl.cdiv(B, TB)
    rem = B % TB                       # 0 -> batch divides evenly into tiles

    # Weights cast once in HBM (tiny) -> halved weight DMA bytes; x stays f32
    # and is cast per tile inside the kernel (no extra HBM pass, no pad copy).
    w1_mm = w1.astype(matmul_dtype)
    w2_mm = w2.astype(matmul_dtype)

    vmem_limit = 48 * 1024 * 1024      # <= v7x's 64 MiB; plenty on v5e/v6e

    use_fused = num_tiles * TB * d_hid * 4 <= fused_z_budget_bytes

    if use_fused:
        kernel = functools.partial(_fused_kernel, num_tiles=num_tiles,
                                   rem=rem, inv_n=1.0 / B)
        return pl.pallas_call(
            kernel,
            out_shape=jax.ShapeDtypeStruct((B, d_out), jnp.float32),
            grid=(2, num_tiles),                       # phase-major
            in_specs=[
                # x tiles stream only during phase 0; phase 1 pins block 0.
                pl.BlockSpec((TB, d_in), lambda p, i: (i * (1 - p), 0)),
                pl.BlockSpec((d_in, d_hid), lambda p, i: (0, 0)),
                pl.BlockSpec((1, d_hid), lambda p, i: (0, 0)),
                pl.BlockSpec((1, d_hid), lambda p, i: (0, 0)),
                pl.BlockSpec((d_hid, d_out), lambda p, i: (0, 0)),
                pl.BlockSpec((1, d_out), lambda p, i: (0, 0)),
            ],
            # Output tiles are produced only in phase 1 (block stays 0 before).
            out_specs=pl.BlockSpec((TB, d_out), lambda p, i: (i * p, 0)),
            scratch_shapes=[
                pltpu.VMEM((num_tiles, TB, d_hid), jnp.float32),  # z cache
                pltpu.VMEM((1, d_hid), jnp.float32),              # sum(z)
                pltpu.VMEM((1, d_hid), jnp.float32),              # sum(z^2)
                pltpu.VMEM((1, d_hid), jnp.float32),              # BN scale
                pltpu.VMEM((1, d_hid), jnp.float32),              # BN shift
            ],
            compiler_params=pltpu.CompilerParams(
                # Phases are ordered and the stats must see every tile before
                # any output tile -> both axes sequential on one TensorCore
                # (HBM-limited workload: halved traffic beats a 2-TC split).
                dimension_semantics=("arbitrary", "arbitrary"),
                vmem_limit_bytes=vmem_limit),
        )(x, w1_mm, gamma, beta, w2_mm, b2)

    # --- Fallback: 2-pass recompute when the z cache won't fit in VMEM ------
    stats_kernel = functools.partial(_stats_kernel, num_tiles=num_tiles,
                                     rem=rem)
    z_sum, z_sumsq = pl.pallas_call(
        stats_kernel,
        out_shape=(jax.ShapeDtypeStruct((1, d_hid), jnp.float32),
                   jax.ShapeDtypeStruct((1, d_hid), jnp.float32)),
        grid=(num_tiles,),
        in_specs=[pl.BlockSpec((TB, d_in), lambda i: (i, 0)),
                  pl.BlockSpec((d_in, d_hid), lambda i: (0, 0))],
        out_specs=(pl.BlockSpec((1, d_hid), lambda i: (0, 0)),
                   pl.BlockSpec((1, d_hid), lambda i: (0, 0))),
        compiler_params=pltpu.CompilerParams(
            dimension_semantics=("arbitrary",),   # accumulators revisited
            vmem_limit_bytes=vmem_limit),
    )(x, w1_mm)

    # Tiny (1,512) BN folding done once in the wrapper (removes per-element
    # mean/var math and two input refs from the hot pass-2 kernel).
    mean = z_sum / B
    var = jnp.maximum(z_sumsq / B - mean * mean, 0.0)   # clamp: cancellation
    scale = gamma * lax.rsqrt(var + BN_EPS)
    shift = beta - mean * scale

    return pl.pallas_call(
        _apply_kernel,
        out_shape=jax.ShapeDtypeStruct((B, d_out), jnp.float32),
        grid=(num_tiles,),
        in_specs=[pl.BlockSpec((TB, d_in), lambda i: (i, 0)),
                  pl.BlockSpec((d_in, d_hid), lambda i: (0, 0)),
                  pl.BlockSpec((1, d_hid), lambda i: (0, 0)),
                  pl.BlockSpec((1, d_hid), lambda i: (0, 0)),
                  pl.BlockSpec((d_hid, d_out), lambda i: (0, 0)),
                  pl.BlockSpec((1, d_out), lambda i: (0, 0))],
        out_specs=pl.BlockSpec((TB, d_out), lambda i: (i, 0)),
        compiler_params=pltpu.CompilerParams(
            dimension_semantics=("parallel",),    # tiles independent
            vmem_limit_bytes=vmem_limit),
    )(x, w1_mm, scale, shift, w2_mm, b2)


# ---------------------------------------------------------------------------
# Parameter init + pure-JAX reference
# ---------------------------------------------------------------------------
def init_params(key):
    """Deterministic parameter init (PyTorch-style uniform fan-in bounds)."""
    k1, k2, k3, k4 = jax.random.split(key, 4)
    in1, hid, out = 256, 512, 2
    bound1 = 1.0 / jnp.sqrt(in1)
    bound2 = 1.0 / jnp.sqrt(hid)
    w1 = jax.random.uniform(k1, (in1, hid), jnp.float32, -bound1, bound1)
    b1 = jax.random.uniform(k2, (1, hid), jnp.float32, -bound1, bound1)
    gamma = jnp.ones((1, hid), jnp.float32)   # BatchNorm1d weight init
    beta = jnp.zeros((1, hid), jnp.float32)   # BatchNorm1d bias init
    w2 = jax.random.uniform(k3, (hid, out), jnp.float32, -bound2, bound2)
    b2 = jax.random.uniform(k4, (1, out), jnp.float32, -bound2, bound2)
    return (w1, b1, gamma, beta, w2, b2)


def reference_forward(x, params, matmul_dtype=None):
    """Pure-JAX reference mirroring the PyTorch module (training-mode BN)."""
    w1, b1, gamma, beta, w2, b2 = params

    def mm(a, b):
        if matmul_dtype is None:
            return jnp.dot(a, b, precision=lax.Precision.HIGHEST)
        return jnp.dot(a.astype(matmul_dtype), b.astype(matmul_dtype),
                       preferred_element_type=jnp.float32)

    h = mm(x, w1) + b1
    mean = jnp.mean(h, axis=0, keepdims=True)
    var = jnp.mean((h - mean) ** 2, axis=0, keepdims=True)
    h = (h - mean) / jnp.sqrt(var + BN_EPS) * gamma + beta
    h = jnp.where(h > 0, h, LEAKY_SLOPE * h)
    logits = mm(h, w2) + b2
    return jax.nn.log_softmax(logits, axis=1)


if __name__ == "__main__":
    key = jax.random.PRNGKey(0)
    kx1, kx2, kp = jax.random.split(key, 3)

    params = init_params(kp)

    # Case 1: small batch -> fused single-tile fast path (BN needs B > 1).
    B1 = 8
    x1 = jax.random.normal(kx1, (B1, 256), jnp.float32)
    out1 = jax.block_until_ready(domain_discriminator(x1, params))
    ref1_bf16 = reference_forward(x1, params, matmul_dtype=jnp.bfloat16)
    ref1_f32 = reference_forward(x1, params)
    assert out1.shape == (B1, 2)
    assert jnp.allclose(out1, ref1_bf16, atol=1e-3, rtol=1e-3), (
        f"bf16-ref max err {jnp.max(jnp.abs(out1 - ref1_bf16))}")
    assert jnp.allclose(out1, ref1_f32, atol=1e-1), (
        f"f32-ref max err {jnp.max(jnp.abs(out1 - ref1_f32))}")
    assert jnp.allclose(jnp.sum(jnp.exp(out1), axis=1), 1.0, atol=1e-4)

    # Case 2: multi-tile fused path with a partial last tile (B % TB != 0) ->
    # exercises unpadded-remainder masking and the phase-0/phase-1 sequencing.
    B2 = 20
    x2 = jax.random.normal(kx2, (B2, 256), jnp.float32)
    out2 = jax.block_until_ready(domain_discriminator(x2, params, block_b=16))
    ref2_bf16 = reference_forward(x2, params, matmul_dtype=jnp.bfloat16)
    assert out2.shape == (B2, 2)
    assert jnp.allclose(out2, ref2_bf16, atol=1e-3, rtol=1e-3), (
        f"bf16-ref max err {jnp.max(jnp.abs(out2 - ref2_bf16))}")
    assert jnp.allclose(jnp.sum(jnp.exp(out2), axis=1), 1.0, atol=1e-4)

    # Case 3: forced 2-pass recompute fallback (large-batch path at small B).
    out3 = jax.block_until_ready(
        domain_discriminator(x2, params, block_b=16, fused_z_budget_bytes=0))
    assert out3.shape == (B2, 2)
    assert jnp.allclose(out3, ref2_bf16, atol=1e-3, rtol=1e-3), (
        f"fallback max err {jnp.max(jnp.abs(out3 - ref2_bf16))}")

    # Case 4: f32-matmul validation path (loose tolerance; Mosaic's f32 matmul
    # emulation differs from XLA's HIGHEST-precision dot).
    out4 = jax.block_until_ready(
        domain_discriminator(x1, params, matmul_dtype=jnp.float32))
    assert jnp.allclose(out4, ref1_f32, atol=5e-2), (
        f"f32-path max err {jnp.max(jnp.abs(out4 - ref1_f32))}")

    print("KERNEL_OK")
</pallas_src>

<mosaic_0001>
module attributes {stable_mosaic.version = 11 : i64} {
  func.func @_fused_kernel(%arg0: i32, %arg1: i32, %arg2: memref<16x256xf32, #tpu.memory_space<vmem>>, %arg3: memref<256x512xbf16, #tpu.memory_space<vmem>>, %arg4: memref<1x512xf32, #tpu.memory_space<vmem>>, %arg5: memref<1x512xf32, #tpu.memory_space<vmem>>, %arg6: memref<512x2xbf16, #tpu.memory_space<vmem>>, %arg7: memref<1x2xf32, #tpu.memory_space<vmem>>, %arg8: memref<16x2xf32, #tpu.memory_space<vmem>>, %arg9: memref<1x16x512xf32, #tpu.memory_space<vmem>>, %arg10: memref<1x512xf32, #tpu.memory_space<vmem>>, %arg11: memref<1x512xf32, #tpu.memory_space<vmem>>, %arg12: memref<1x512xf32, #tpu.memory_space<vmem>>, %arg13: memref<1x512xf32, #tpu.memory_space<vmem>>) attributes {dimension_semantics = [#tpu.dimension_semantics<arbitrary>, #tpu.dimension_semantics<arbitrary>], iteration_bounds = array<i64: 2, 1>, scalar_prefetch = 0 : i64, scratch_operands = 5 : i64, tpu.core_type = #tpu.core_type<tc>, window_params = [{transform_indices = @transform_0, window_bounds = array<i64: 16, 256>}, {pipeline_mode = #tpu.pipeline_mode<synchronous>, transform_indices = @transform_1, window_bounds = array<i64: 256, 512>}, {pipeline_mode = #tpu.pipeline_mode<synchronous>, transform_indices = @transform_2, window_bounds = array<i64: 1, 512>}, {pipeline_mode = #tpu.pipeline_mode<synchronous>, transform_indices = @transform_3, window_bounds = array<i64: 1, 512>}, {pipeline_mode = #tpu.pipeline_mode<synchronous>, transform_indices = @transform_4, window_bounds = array<i64: 512, 2>}, {pipeline_mode = #tpu.pipeline_mode<synchronous>, transform_indices = @transform_5, window_bounds = array<i64: 1, 2>}, {transform_indices = @transform_6, window_bounds = array<i64: 16, 2>}]} {
    %c0_i32 = arith.constant 0 : i32
    %0 = arith.cmpi eq, %arg0, %c0_i32 : i32
    %c0_i32_0 = arith.constant 0 : i32
    %1 = arith.cmpi eq, %arg1, %c0_i32_0 : i32
    %2 = arith.andi %0, %1 : i1
    %3 = arith.extui %2 : i1 to i32
    %c0_i32_1 = arith.constant 0 : i32
    %4 = arith.cmpi ne, %3, %c0_i32_1 : i32
    scf.if %4 {
      %cst = arith.constant 0.000000e+00 : f32
      %11 = vector.broadcast %cst : f32 to vector<1x512xf32>
      %c0 = arith.constant 0 : index
      %c0_5 = arith.constant 0 : index
      %12 = vector.load %arg10[%c0, %c0_5] : memref<1x512xf32, #tpu.memory_space<vmem>>, vector<1x512xf32>
      tpu.vector_store %arg10[%c0, %c0_5], %11 {strides = array<i32>} : memref<1x512xf32, #tpu.memory_space<vmem>>, vector<1x512xf32>,
      %cst_6 = arith.constant 0.000000e+00 : f32
      %13 = vector.broadcast %cst_6 : f32 to vector<1x512xf32>
      %c0_7 = arith.constant 0 : index
      %c0_8 = arith.constant 0 : index
      %14 = vector.load %arg11[%c0_7, %c0_8] : memref<1x512xf32, #tpu.memory_space<vmem>>, vector<1x512xf32>
      tpu.vector_store %arg11[%c0_7, %c0_8], %13 {strides = array<i32>} : memref<1x512xf32, #tpu.memory_space<vmem>>, vector<1x512xf32>,
    } else {
    }
    %c0_i32_2 = arith.constant 0 : i32
    %5 = arith.cmpi eq, %arg0, %c0_i32_2 : i32
    %6 = arith.extui %5 : i1 to i32
    %c0_i32_3 = arith.constant 0 : i32
    %7 = arith.cmpi ne, %6, %c0_i32_3 : i32
    scf.if %7 {
      %c0 = arith.constant 0 : index
      %c0_5 = arith.constant 0 : index
      %11 = vector.load %arg2[%c0, %c0_5] : memref<16x256xf32, #tpu.memory_space<vmem>>, vector<16x256xf32>
      %12 = arith.truncf %11 : vector<16x256xf32> to vector<16x256xbf16>
      %c0_6 = arith.constant 0 : index
      %c0_7 = arith.constant 0 : index
      %13 = vector.load %arg3[%c0_6, %c0_7] : memref<256x512xbf16, #tpu.memory_space<vmem>>, vector<256x512xbf16>
      %cst = arith.constant dense<0.000000e+00> : vector<16x512xf32>
      %14 = tpu.matmul %12, %13, %cst {dimension_numbers = #tpu.dot_dimension_numbers<[1], [0], [0], [1], [0, 0, 1, 1], [], []>} : vector<16x256xbf16>, vector<256x512xbf16>, vector<16x512xf32> -> vector<16x512xf32>
      %15 = arith.index_cast %arg1 : i32 to index
      %c0_8 = arith.constant 0 : index
      %c0_9 = arith.constant 0 : index
      %16 = vector.load %arg9[%15, %c0_8, %c0_9] : memref<1x16x512xf32, #tpu.memory_space<vmem>>, vector<1x16x512xf32>
      %17 = vector.shape_cast %16 : vector<1x16x512xf32> to vector<16x512xf32>
      %18 = vector.shape_cast %14 : vector<16x512xf32> to vector<1x16x512xf32>
      tpu.vector_store %arg9[%15, %c0_8, %c0_9], %18 {strides = array<i32>} : memref<1x16x512xf32, #tpu.memory_space<vmem>>, vector<1x16x512xf32>,
      %c0_i32_10 = arith.constant 0 : i32
      %19 = arith.cmpi slt, %arg1, %c0_i32_10 : i32
      %20 = arith.extui %19 : i1 to i32
      %c0_i32_11 = arith.constant 0 : i32
      %21 = arith.cmpi ne, %20, %c0_i32_11 : i32
      scf.if %21 {
        %c0_14 = arith.constant 0 : index
        %c0_15 = arith.constant 0 : index
        %25 = vector.load %arg10[%c0_14, %c0_15] : memref<1x512xf32, #tpu.memory_space<vmem>>, vector<1x512xf32>
        %cst_16 = arith.constant dense<0.000000e+00> : vector<512xf32>
        %26 = vector.multi_reduction <add>, %14, %cst_16 [0] : vector<16x512xf32> to vector<512xf32>
        %27 = vector.shape_cast %26 : vector<512xf32> to vector<1x512xf32>
        %28 = arith.addf %25, %27 : vector<1x512xf32>
        %c0_17 = arith.constant 0 : index
        %c0_18 = arith.constant 0 : index
        %29 = vector.load %arg10[%c0_17, %c0_18] : memref<1x512xf32, #tpu.memory_space<vmem>>, vector<1x512xf32>
        tpu.vector_store %arg10[%c0_17, %c0_18], %28 {strides = array<i32>} : memref<1x512xf32, #tpu.memory_space<vmem>>, vector<1x512xf32>,
        %c0_19 = arith.constant 0 : index
        %c0_20 = arith.constant 0 : index
        %30 = vector.load %arg11[%c0_19, %c0_20] : memref<1x512xf32, #tpu.memory_space<vmem>>, vector<1x512xf32>
        %31 = arith.mulf %14, %14 : vector<16x512xf32>
        %cst_21 = arith.constant dense<0.000000e+00> : vector<512xf32>
        %32 = vector.multi_reduction <add>, %31, %cst_21 [0] : vector<16x512xf32> to vector<512xf32>
        %33 = vector.shape_cast %32 : vector<512xf32> to vector<1x512xf32>
        %34 = arith.addf %30, %33 : vector<1x512xf32>
        %c0_22 = arith.constant 0 : index
        %c0_23 = arith.constant 0 : index
        %35 = vector.load %arg11[%c0_22, %c0_23] : memref<1x512xf32, #tpu.memory_space<vmem>>, vector<1x512xf32>
        tpu.vector_store %arg11[%c0_22, %c0_23], %34 {strides = array<i32>} : memref<1x512xf32, #tpu.memory_space<vmem>>, vector<1x512xf32>,
      } else {
      }
      %c0_i32_12 = arith.constant 0 : i32
      %22 = arith.cmpi eq, %arg1, %c0_i32_12 : i32
      %23 = arith.extui %22 : i1 to i32
      %c0_i32_13 = arith.constant 0 : i32
      %24 = arith.cmpi ne, %23, %c0_i32_13 : i32
      scf.if %24 {
        %25 = tpu.iota {dimensions = array<i32: 0>} : vector<16x1xi32>
        %c8_i32 = arith.constant 8 : i32
        %26 = vector.broadcast %c8_i32 : i32 to vector<16x1xi32>
        %27 = arith.cmpi slt, %25, %26 : vector<16x1xi32>
        %cst_14 = arith.constant 0.000000e+00 : f32
        %28 = vector.shape_cast %27 : vector<16x1xi1> to vector<16x1xi1>
        %29 = vector.broadcast %28 : vector<16x1xi1> to vector<16x512xi1>
        %30 = vector.broadcast %cst_14 : f32 to vector<16x512xf32>
        %31 = arith.select %29, %14, %30 : vector<16x512xi1>, vector<16x512xf32>
        %c0_15 = arith.constant 0 : index
        %c0_16 = arith.constant 0 : index
        %32 = vector.load %arg10[%c0_15, %c0_16] : memref<1x512xf32, #tpu.memory_space<vmem>>, vector<1x512xf32>
        %cst_17 = arith.constant dense<0.000000e+00> : vector<512xf32>
        %33 = vector.multi_reduction <add>, %31, %cst_17 [0] : vector<16x512xf32> to vector<512xf32>
        %34 = vector.shape_cast %33 : vector<512xf32> to vector<1x512xf32>
        %35 = arith.addf %32, %34 : vector<1x512xf32>
        %c0_18 = arith.constant 0 : index
        %c0_19 = arith.constant 0 : index
        %36 = vector.load %arg10[%c0_18, %c0_19] : memref<1x512xf32, #tpu.memory_space<vmem>>, vector<1x512xf32>
        tpu.vector_store %arg10[%c0_18, %c0_19], %35 {strides = array<i32>} : memref<1x512xf32, #tpu.memory_space<vmem>>, vector<1x512xf32>,
        %c0_20 = arith.constant 0 : index
        %c0_21 = arith.constant 0 : index
        %37 = vector.load %arg11[%c0_20, %c0_21] : memref<1x512xf32, #tpu.memory_space<vmem>>, vector<1x512xf32>
        %38 = arith.mulf %31, %31 : vector<16x512xf32>
        %cst_22 = arith.constant dense<0.000000e+00> : vector<512xf32>
        %39 = vector.multi_reduction <add>, %38, %cst_22 [0] : vector<16x512xf32> to vector<512xf32>
        %40 = vector.shape_cast %39 : vector<512xf32> to vector<1x512xf32>
        %41 = arith.addf %37, %40 : vector<1x512xf32>
        %c0_23 = arith.constant 0 : index
        %c0_24 = arith.constant 0 : index
        %42 = vector.load %arg11[%c0_23, %c0_24] : memref<1x512xf32, #tpu.memory_space<vmem>>, vector<1x512xf32>
        tpu.vector_store %arg11[%c0_23, %c0_24], %41 {strides = array<i32>} : memref<1x512xf32, #tpu.memory_space<vmem>>, vector<1x512xf32>,
      } else {
      }
    } else {
    }
    %c1_i32 = arith.constant 1 : i32
    %8 = arith.cmpi eq, %arg0, %c1_i32 : i32
    %9 = arith.extui %8 : i1 to i32
    %c0_i32_4 = arith.constant 0 : i32
    %10 = arith.cmpi ne, %9, %c0_i32_4 : i32
    scf.if %10 {
      %c0_i32_5 = arith.constant 0 : i32
      %11 = arith.cmpi eq, %arg1, %c0_i32_5 : i32
      %12 = arith.extui %11 : i1 to i32
      %c0_i32_6 = arith.constant 0 : i32
      %13 = arith.cmpi ne, %12, %c0_i32_6 : i32
      scf.if %13 {
        %c0_21 = arith.constant 0 : index
        %c0_22 = arith.constant 0 : index
        %47 = vector.load %arg10[%c0_21, %c0_22] : memref<1x512xf32, #tpu.memory_space<vmem>>, vector<1x512xf32>
        %cst_23 = arith.constant 1.250000e-01 : f32
        %48 = vector.broadcast %cst_23 : f32 to vector<1x512xf32>
        %49 = arith.mulf %47, %48 : vector<1x512xf32>
        %c0_24 = arith.constant 0 : index
        %c0_25 = arith.constant 0 : index
        %50 = vector.load %arg11[%c0_24, %c0_25] : memref<1x512xf32, #tpu.memory_space<vmem>>, vector<1x512xf32>
        %cst_26 = arith.constant 1.250000e-01 : f32
        %51 = vector.broadcast %cst_26 : f32 to vector<1x512xf32>
        %52 = arith.mulf %50, %51 : vector<1x512xf32>
        %53 = arith.mulf %49, %49 : vector<1x512xf32>
        %54 = arith.subf %52, %53 : vector<1x512xf32>
        %cst_27 = arith.constant 0.000000e+00 : f32
        %55 = vector.broadcast %cst_27 : f32 to vector<1x512xf32>
        %56 = arith.maximumf %54, %55 : vector<1x512xf32>
        %c0_28 = arith.constant 0 : index
        %c0_29 = arith.constant 0 : index
        %57 = vector.load %arg4[%c0_28, %c0_29] : memref<1x512xf32, #tpu.memory_space<vmem>>, vector<1x512xf32>
        %cst_30 = arith.constant 9.99999974E-6 : f32
        %58 = vector.broadcast %cst_30 : f32 to vector<1x512xf32>
        %59 = arith.addf %56, %58 : vector<1x512xf32>
        %60 = math.rsqrt %59 : vector<1x512xf32>
        %61 = arith.mulf %57, %60 : vector<1x512xf32>
        %c0_31 = arith.constant 0 : index
        %c0_32 = arith.constant 0 : index
        %62 = vector.load %arg12[%c0_31, %c0_32] : memref<1x512xf32, #tpu.memory_space<vmem>>, vector<1x512xf32>
        tpu.vector_store %arg12[%c0_31, %c0_32], %61 {strides = array<i32>} : memref<1x512xf32, #tpu.memory_space<vmem>>, vector<1x512xf32>,
        %c0_33 = arith.constant 0 : index
        %c0_34 = arith.constant 0 : index
        %63 = vector.load %arg5[%c0_33, %c0_34] : memref<1x512xf32, #tpu.memory_space<vmem>>, vector<1x512xf32>
        %64 = arith.mulf %49, %61 : vector<1x512xf32>
        %65 = arith.subf %63, %64 : vector<1x512xf32>
        %c0_35 = arith.constant 0 : index
        %c0_36 = arith.constant 0 : index
        %66 = vector.load %arg13[%c0_35, %c0_36] : memref<1x512xf32, #tpu.memory_space<vmem>>, vector<1x512xf32>
        tpu.vector_store %arg13[%c0_35, %c0_36], %65 {strides = array<i32>} : memref<1x512xf32, #tpu.memory_space<vmem>>, vector<1x512xf32>,
      } else {
      }
      %14 = arith.index_cast %arg1 : i32 to index
      %c0 = arith.constant 0 : index
      %c0_7 = arith.constant 0 : index
      %15 = vector.load %arg9[%14, %c0, %c0_7] : memref<1x16x512xf32, #tpu.memory_space<vmem>>, vector<1x16x512xf32>
      %16 = vector.shape_cast %15 : vector<1x16x512xf32> to vector<16x512xf32>
      %c0_8 = arith.constant 0 : index
      %c0_9 = arith.constant 0 : index
      %17 = vector.load %arg12[%c0_8, %c0_9] : memref<1x512xf32, #tpu.memory_space<vmem>>, vector<1x512xf32>
      %18 = vector.broadcast %17 : vector<1x512xf32> to vector<16x512xf32>
      %19 = arith.mulf %16, %18 : vector<16x512xf32>
      %c0_10 = arith.constant 0 : index
      %c0_11 = arith.constant 0 : index
      %20 = vector.load %arg13[%c0_10, %c0_11] : memref<1x512xf32, #tpu.memory_space<vmem>>, vector<1x512xf32>
      %21 = vector.broadcast %20 : vector<1x512xf32> to vector<16x512xf32>
      %22 = arith.addf %19, %21 : vector<16x512xf32>
      %cst = arith.constant 0.00999999977 : f32
      %23 = vector.broadcast %cst : f32 to vector<16x512xf32>
      %24 = arith.mulf %23, %22 : vector<16x512xf32>
      %25 = arith.maximumf %22, %24 : vector<16x512xf32>
      %26 = arith.truncf %25 : vector<16x512xf32> to vector<16x512xbf16>
      %c0_12 = arith.constant 0 : index
      %c0_13 = arith.constant 0 : index
      %27 = vector.load %arg6[%c0_12, %c0_13] : memref<512x2xbf16, #tpu.memory_space<vmem>>, vector<512x2xbf16>
      %cst_14 = arith.constant dense<0.000000e+00> : vector<16x2xf32>
      %28 = tpu.matmul %26, %27, %cst_14 {dimension_numbers = #tpu.dot_dimension_numbers<[1], [0], [0], [1], [0, 0, 1, 1], [], []>} : vector<16x512xbf16>, vector<512x2xbf16>, vector<16x2xf32> -> vector<16x2xf32>
      %c0_15 = arith.constant 0 : index
      %c0_16 = arith.constant 0 : index
      %29 = vector.load %arg7[%c0_15, %c0_16] : memref<1x2xf32, #tpu.memory_space<vmem>>, vector<1x2xf32>
      %30 = vector.broadcast %29 : vector<1x2xf32> to vector<16x2xf32>
      %31 = arith.addf %28, %30 : vector<16x2xf32>
      %32 = vector.extract_strided_slice %31 {offsets = [0, 0], sizes = [16, 1], strides = [1, 1]} : vector<16x2xf32> to vector<16x1xf32>
      %33 = vector.extract_strided_slice %31 {offsets = [0, 1], sizes = [16, 1], strides = [1, 1]} : vector<16x2xf32> to vector<16x1xf32>
      %34 = arith.maximumf %32, %33 : vector<16x1xf32>
      %35 = arith.subf %32, %33 : vector<16x1xf32>
      %36 = math.absf %35 : vector<16x1xf32>
      %cst_17 = arith.constant 0.000000e+00 : f32
      %37 = vector.broadcast %cst_17 : f32 to vector<16x1xf32>
      %38 = arith.subf %37, %36 : vector<16x1xf32>
      %39 = math.exp %38 : vector<16x1xf32>
      %cst_18 = arith.constant 1.000000e+00 : f32
      %40 = vector.broadcast %cst_18 : f32 to vector<16x1xf32>
      %41 = arith.addf %40, %39 : vector<16x1xf32>
      %42 = math.log %41 : vector<16x1xf32>
      %43 = arith.addf %34, %42 : vector<16x1xf32>
      %44 = vector.broadcast %43 : vector<16x1xf32> to vector<16x2xf32>
      %45 = arith.subf %31, %44 : vector<16x2xf32>
      %c0_19 = arith.constant 0 : index
      %c0_20 = arith.constant 0 : index
      %46 = vector.load %arg8[%c0_19, %c0_20] : memref<16x2xf32, #tpu.memory_space<vmem>>, vector<16x2xf32>
      tpu.vector_store %arg8[%c0_19, %c0_20], %45 {strides = array<i32>} : memref<16x2xf32, #tpu.memory_space<vmem>>, vector<16x2xf32>,
    } else {
    }
    return
  }
  func.func @transform_0(%arg0: i32, %arg1: i32) -> (i32, i32) {
    %c1_i32 = arith.constant 1 : i32
    %0 = arith.subi %c1_i32, %arg0 : i32
    %1 = arith.muli %arg1, %0 : i32
    %c0_i32 = arith.constant 0 : i32
    %c0_i32_0 = arith.constant 0 : i32
    return %1, %c0_i32 : i32, i32
  }
  func.func @transform_1(%arg0: i32, %arg1: i32) -> (i32, i32) {
    %c0_i32 = arith.constant 0 : i32
    %c0_i32_0 = arith.constant 0 : i32
    %c0_i32_1 = arith.constant 0 : i32
    return %c0_i32, %c0_i32_0 : i32, i32
  }
  func.func @transform_2(%arg0: i32, %arg1: i32) -> (i32, i32) {
    %c0_i32 = arith.constant 0 : i32
    %c0_i32_0 = arith.constant 0 : i32
    %c0_i32_1 = arith.constant 0 : i32
    return %c0_i32, %c0_i32_0 : i32, i32
  }
  func.func @transform_3(%arg0: i32, %arg1: i32) -> (i32, i32) {
    %c0_i32 = arith.constant 0 : i32
    %c0_i32_0 = arith.constant 0 : i32
    %c0_i32_1 = arith.constant 0 : i32
    return %c0_i32, %c0_i32_0 : i32, i32
  }
  func.func @transform_4(%arg0: i32, %arg1: i32) -> (i32, i32) {
    %c0_i32 = arith.constant 0 : i32
    %c0_i32_0 = arith.constant 0 : i32
    %c0_i32_1 = arith.constant 0 : i32
    return %c0_i32, %c0_i32_0 : i32, i32
  }
  func.func @transform_5(%arg0: i32, %arg1: i32) -> (i32, i32) {
    %c0_i32 = arith.constant 0 : i32
    %c0_i32_0 = arith.constant 0 : i32
    %c0_i32_1 = arith.constant 0 : i32
    return %c0_i32, %c0_i32_0 : i32, i32
  }
  func.func @transform_6(%arg0: i32, %arg1: i32) -> (i32, i32) {
    %0 = arith.muli %arg1, %arg0 : i32
    %c0_i32 = arith.constant 0 : i32
    %c0_i32_0 = arith.constant 0 : i32
    return %0, %c0_i32 : i32, i32
  }
}

</mosaic_0001>

<llo_original>
// kernel: tpu_custom_call.1
$region0: #{tpu_custom_call.1}
  #allocation0 [shape = 'u32[]', space=smem, size = 0x4, offset = 0x4, fixed_abs, tag = 'smem constant byte address 0x4 - core index']
  #allocation1 [shape = 'u32[144,128]{1,0:T(1,128)}', space=vmem, size = 0x12000, scoped, tag = 'internal scratch']
  #allocation2 [shape = 'f32[1,16,512]{2,1,0:T(8,128)}', space=vmem, size = 0x8000, scoped, tag = 'scratch operand']
  #allocation3 [shape = 'f32[1,512]{1,0:T(1,128)}', space=vmem, size = 0x800, scoped, tag = 'scratch operand']
  #allocation4 [shape = 'f32[1,512]{1,0:T(1,128)}', space=vmem, size = 0x800, scoped, tag = 'scratch operand']
  #allocation5 [shape = 'f32[1,512]{1,0:T(1,128)}', space=vmem, size = 0x800, scoped, tag = 'scratch operand']
  #allocation6 [shape = 'f32[1,512]{1,0:T(1,128)}', space=vmem, size = 0x800, scoped, tag = 'scratch operand']
  %s0 = inlined_call_operand.vmem [shape: f32[8,256], index: 0, kind: input, shape index: {}]
  %s1 = inlined_call_operand.hbm [shape: bf16[256,512], index: 1, kind: input, shape index: {}]
  %s2 = inlined_call_operand.vmem [shape: f32[1,512], index: 2, kind: input, shape index: {}]
  %s3 = inlined_call_operand.vmem [shape: f32[1,512], index: 3, kind: input, shape index: {}]
  %s4 = inlined_call_operand.vmem [shape: bf16[512,2], index: 4, kind: input, shape index: {}]
  %s5 = inlined_call_operand.vmem [shape: f32[1,2], index: 5, kind: input, shape index: {}]
  %s6 = inlined_call_operand.vmem [shape: f32[8,2], index: 6, kind: output, shape index: {}]
  %s7 = sld [smem:[#allocation0]]
  $region119: #{tpu_custom_call.1} parent=0
    _
  %s9 = ssub.s32 1, %s7
  %s10 = scalar_select 0, %s9, %s7
  $region1: #{tpu_custom_call.1} parent=0
    #allocation7 [shape = 'u8[262144]{0}', space=vmem, size = 0x40000, scoped, tag = 'input window, operand 1, single buffered']
    #allocation8 [shape = 's32[2]{0}', space=sflag, size = 0x8, scoped, tag = 'scoped memory for tpu_custom_call.1']
    #allocation9 [shape = 'u8[16384]{0}', space=vmem, size = 0x4000, scoped, tag = 'output window, operand 0']
    %11 = vsyncpa [#allocation8], 0
    loop: start=0, step=1, limit=4
    $region2: #{tpu_custom_call.1} parent=1 // loop_pre_header
      _
    $region3: #{tpu_custom_call.1} parent=1 // loop_header
      %s13 = sphi 0, %s17
      %p14 = scmp.ge.s32.totalorder %s13, 4
      %s20 = sphi 0, %s32
      %s21 = sphi 0, %s28
      %s22 = sphi 0, %s20
      %s23 = sphi 0, %s21
      %s24 = sphi 0, %s22
      %s25 = sphi 0, %s23
      %s39 = sphi 0, %s41
      %s42 = sphi 0, %s39
      %s43 = sphi 0, %s42
      %s59 = sphi 0, %s43
      %s63 = sphi 0, %s63
      %s65 = sphi 0, %s63
      %s66 = sphi 0, %s65
      %s80 = sphi 0, %s66
      %s84 = sphi 0, %s84
      %s86 = sphi 0, %s84
      %s87 = sphi 0, %s86
      %s101 = sphi 0, %s87
      %s105 = sphi 0, %s105
      %s107 = sphi 0, %s105
      %s108 = sphi 0, %s107
      %s122 = sphi 0, %s108
      %s126 = sphi 0, %s126
      %s128 = sphi 0, %s126
      %s129 = sphi 0, %s128
      %s143 = sphi 0, %s129
      %s147 = sphi 0, %s147
      %s149 = sphi 0, %s147
      %s150 = sphi 0, %s149
      %s164 = sphi 0, %s150
      %s172 = sphi 0, %s174
      %s175 = sphi 0, %s172
      %s176 = sphi 0, %s175
      %s192 = sphi 0, %s176
    $region4: #{tpu_custom_call.1} parent=1 // loop_header_branch
      %16 = sbr.rel (%p14) target = $region8
    $region5: #{tpu_custom_call.1} parent=1 // loop_body
      %s18 = ssub.s32 %s13, 1
      %s19 = ssub.s32 %s13, 2
      %s26 = sadd.s32 1, %s21
      %p27 = scmp.ge.s32.totalorder %s26, 1
      %s28 = scalar_select %p27, 0, %s26
      %s29 = sadd.s32 1, %s20
      %s30 = scalar_select %p27, %s29, %s20
      %p31 = scmp.ge.s32.totalorder %s30, 2
      %s32 = scalar_select %p31, 0, %s30
      %s33 = ssub.s32 1, %s20
      %s34 = smul.u32 %s21, %s33
      %s35 = ssub.s32 1, %s32
      %s36 = smul.u32 %s28, %s35
      %s37 = ssub.s32 %s34, %s36
      %p38 = scmp.eq.s32.totalorder %s37, 0
      %s40 = sadd.s32 %s39, 1
      %s41 = scalar_select %p38, %s39, %s40
      %p44 = pneg %p38
      %p45 = scmp.eq.s32.totalorder %s13, 1
      %p46 = por %p44, %p45
      %p47 = scmp.ne.s32.totalorder %s39, %s42
      %p48 = scmp.eq.s32.totalorder %s13, 0
      %p49 = por %p47, %p48
      %p50 = scmp.ne.s32.totalorder %s39, %s42
      %p51 = scmp.eq.s32.totalorder %s18, 1
      %p52 = por %p50, %p51
      %p53 = scmp.ne.s32.totalorder %s42, %s43
      %p54 = scmp.eq.s32.totalorder %s18, 0
      %p55 = por %p53, %p54
      %p56 = scmp.ne.s32.totalorder %s42, %s43
      %p57 = scmp.eq.s32.totalorder %s19, 1
      %p58 = por %p56, %p57
      %p60 = scmp.ne.s32.totalorder %s43, %s59
      %p61 = scmp.eq.s32.totalorder %s19, 0
      %p62 = por %p60, %p61
      %s64 = sadd.s32 %s63, 1
      %p67 = scmp.eq.s32.totalorder %s13, 1
      %p68 = scmp.ne.s32.totalorder %s63, %s65
      %p69 = scmp.eq.s32.totalorder %s13, 0
      %p70 = por %p68, %p69
      %p71 = scmp.ne.s32.totalorder %s63, %s65
      %p72 = scmp.eq.s32.totalorder %s18, 1
      %p73 = por %p71, %p72
      %p74 = scmp.ne.s32.totalorder %s65, %s66
      %p75 = scmp.eq.s32.totalorder %s18, 0
      %p76 = por %p74, %p75
      %p77 = scmp.ne.s32.totalorder %s65, %s66
      %p78 = scmp.eq.s32.totalorder %s19, 1
      %p79 = por %p77, %p78
      %p81 = scmp.ne.s32.totalorder %s66, %s80
      %p82 = scmp.eq.s32.totalorder %s19, 0
      %p83 = por %p81, %p82
      %s85 = sadd.s32 %s84, 1
      %p88 = scmp.eq.s32.totalorder %s13, 1
      %p89 = scmp.ne.s32.totalorder %s84, %s86
      %p90 = scmp.eq.s32.totalorder %s13, 0
      %p91 = por %p89, %p90
      %p92 = scmp.ne.s32.totalorder %s84, %s86
      %p93 = scmp.eq.s32.totalorder %s18, 1
      %p94 = por %p92, %p93
      %p95 = scmp.ne.s32.totalorder %s86, %s87
      %p96 = scmp.eq.s32.totalorder %s18, 0
      %p97 = por %p95, %p96
      %p98 = scmp.ne.s32.totalorder %s86, %s87
      %p99 = scmp.eq.s32.totalorder %s19, 1
      %p100 = por %p98, %p99
      %p102 = scmp.ne.s32.totalorder %s87, %s101
      %p103 = scmp.eq.s32.totalorder %s19, 0
      %p104 = por %p102, %p103
      %s106 = sadd.s32 %s105, 1
      %p109 = scmp.eq.s32.totalorder %s13, 1
      %p110 = scmp.ne.s32.totalorder %s105, %s107
      %p111 = scmp.eq.s32.totalorder %s13, 0
      %p112 = por %p110, %p111
      %p113 = scmp.ne.s32.totalorder %s105, %s107
      %p114 = scmp.eq.s32.totalorder %s18, 1
      %p115 = por %p113, %p114
      %p116 = scmp.ne.s32.totalorder %s107, %s108
      %p117 = scmp.eq.s32.totalorder %s18, 0
      %p118 = por %p116, %p117
      %p119 = scmp.ne.s32.totalorder %s107, %s108
      %p120 = scmp.eq.s32.totalorder %s19, 1
      %p121 = por %p119, %p120
      %p123 = scmp.ne.s32.totalorder %s108, %s122
      %p124 = scmp.eq.s32.totalorder %s19, 0
      %p125 = por %p123, %p124
      %s127 = sadd.s32 %s126, 1
      %p130 = scmp.eq.s32.totalorder %s13, 1
      %p131 = scmp.ne.s32.totalorder %s126, %s128
      %p132 = scmp.eq.s32.totalorder %s13, 0
      %p133 = por %p131, %p132
      %p134 = scmp.ne.s32.totalorder %s126, %s128
      %p135 = scmp.eq.s32.totalorder %s18, 1
      %p136 = por %p134, %p135
      %p137 = scmp.ne.s32.totalorder %s128, %s129
      %p138 = scmp.eq.s32.totalorder %s18, 0
      %p139 = por %p137, %p138
      %p140 = scmp.ne.s32.totalorder %s128, %s129
      %p141 = scmp.eq.s32.totalorder %s19, 1
      %p142 = por %p140, %p141
      %p144 = scmp.ne.s32.totalorder %s129, %s143
      %p145 = scmp.eq.s32.totalorder %s19, 0
      %p146 = por %p144, %p145
      %s148 = sadd.s32 %s147, 1
      %p151 = scmp.eq.s32.totalorder %s13, 1
      %p152 = scmp.ne.s32.totalorder %s147, %s149
      %p153 = scmp.eq.s32.totalorder %s13, 0
      %p154 = por %p152, %p153
      %p155 = scmp.ne.s32.totalorder %s147, %s149
      %p156 = scmp.eq.s32.totalorder %s18, 1
      %p157 = por %p155, %p156
      %p158 = scmp.ne.s32.totalorder %s149, %s150
      %p159 = scmp.eq.s32.totalorder %s18, 0
      %p160 = por %p158, %p159
      %p161 = scmp.ne.s32.totalorder %s149, %s150
      %p162 = scmp.eq.s32.totalorder %s19, 1
      %p163 = por %p161, %p162
      %p165 = scmp.ne.s32.totalorder %s150, %s164
      %p166 = scmp.eq.s32.totalorder %s19, 0
      %p167 = por %p165, %p166
      %s168 = smul.u32 %s21, %s20
      %s169 = smul.u32 %s28, %s32
      %s170 = ssub.s32 %s168, %s169
      %p171 = scmp.eq.s32.totalorder %s170, 0
      %s173 = sadd.s32 %s172, 1
      %s174 = scalar_select %p171, %s172, %s173
      %p177 = pneg %p171
      %p178 = scmp.eq.s32.totalorder %s13, 1
      %p179 = por %p177, %p178
      %p180 = scmp.ne.s32.totalorder %s172, %s175
      %p181 = scmp.eq.s32.totalorder %s13, 0
      %p182 = por %p180, %p181
      %p183 = scmp.ne.s32.totalorder %s172, %s175
      %p184 = scmp.eq.s32.totalorder %s18, 1
      %p185 = por %p183, %p184
      %p186 = scmp.ne.s32.totalorder %s175, %s176
      %p187 = scmp.eq.s32.totalorder %s18, 0
      %p188 = por %p186, %p187
      %p189 = scmp.ne.s32.totalorder %s175, %s176
      %p190 = scmp.eq.s32.totalorder %s19, 1
      %p191 = por %p189, %p190
      %p193 = scmp.ne.s32.totalorder %s176, %s192
      %p194 = scmp.eq.s32.totalorder %s19, 0
      %p195 = por %p193, %p194
      %p196 = scmp.le.s32.totalorder 1, %s13
      %p197 = scmp.lt.s32.totalorder %s13, 3
      %p198 = pnand %p196, %p197
      %p199 = pneg %p198
      // Predicated region
      $region9: #{tpu_custom_call.1} parent=5 // pred_check
        _
      $region10: #{tpu_custom_call.1} parent=5 // pred_check_branch
        %201 = sbr.rel (%p198) target = $region12
      $region11: #{tpu_custom_call.1} parent=5 // pred_region
        %s202 = ssub.s32 %s13, 1
        // Predicated region
        $region13: #{tpu_custom_call.1} parent=11 // pred_check
          %p203 = pneg %p76
        $region14: #{tpu_custom_call.1} parent=11 // pred_check_branch
          %205 = sbr.rel (%p203) target = $region16
        $region15: #{tpu_custom_call.1} parent=11 // pred_region
          %s207 = ssub.s32 8192, 8192
          %208 = vsyncadd [#allocation8], %s207
          %s209 = sshll.u32 [#allocation7], 4
          %s210 = int_to_ptr.vmem [resolvable:$true] %s209
          %215 = dma.hbm_to_vmem [thread:$0]  %s1, 8192, %s210, [#allocation8], 256, 256, 16
        $region16: #{tpu_custom_call.1} parent=11 // pred_fallthru
          _
        // Predicated region
        $region17: #{tpu_custom_call.1} parent=11 // pred_check
          %p216 = pneg %p97
        $region18: #{tpu_custom_call.1} parent=11 // pred_check_branch
          %218 = sbr.rel (%p216) target = $region20
        $region19: #{tpu_custom_call.1} parent=11 // pred_region
          _
        $region20: #{tpu_custom_call.1} parent=11 // pred_fallthru
          _
        // Predicated region
        $region21: #{tpu_custom_call.1} parent=11 // pred_check
          %p219 = pneg %p118
        $region22: #{tpu_custom_call.1} parent=11 // pred_check_branch
          %221 = sbr.rel (%p219) target = $region24
        $region23: #{tpu_custom_call.1} parent=11 // pred_region
          _
        $region24: #{tpu_custom_call.1} parent=11 // pred_fallthru
          _
        // Predicated region
        $region25: #{tpu_custom_call.1} parent=11 // pred_check
          %p222 = pneg %p139
        $region26: #{tpu_custom_call.1} parent=11 // pred_check_branch
          %224 = sbr.rel (%p222) target = $region28
        $region27: #{tpu_custom_call.1} parent=11 // pred_region
          _
        $region28: #{tpu_custom_call.1} parent=11 // pred_fallthru
          _
        // Predicated region
        $region29: #{tpu_custom_call.1} parent=11 // pred_check
          %p225 = pneg %p160
        $region30: #{tpu_custom_call.1} parent=11 // pred_check_branch
          %227 = sbr.rel (%p225) target = $region32
        $region31: #{tpu_custom_call.1} parent=11 // pred_region
          _
        $region32: #{tpu_custom_call.1} parent=11 // pred_fallthru
          _
      $region12: #{tpu_custom_call.1} parent=5 // pred_fallthru
        _
      %p228 = scmp.lt.s32.totalorder %s13, 2
      // Predicated region
      $region33: #{tpu_custom_call.1} parent=5 // pred_check
        %p229 = pneg %p228
      $region34: #{tpu_custom_call.1} parent=5 // pred_check_branch
        %231 = sbr.rel (%p229) target = $region36
      $region35: #{tpu_custom_call.1} parent=5 // pred_region
        // Predicated region
        $region37: #{tpu_custom_call.1} parent=35 // pred_check
          %p232 = pneg %p49
        $region38: #{tpu_custom_call.1} parent=35 // pred_check_branch
          %234 = sbr.rel (%p232) target = $region40
        $region39: #{tpu_custom_call.1} parent=35 // pred_region
          %s235 = ssub.s32 1, %s20
          %s236 = smul.u32 %s21, %s235
          %s237 = smul.u32 2, %s236
          %s238 = ssub.s32 1, %s237
          %s239 = smul.u32 128, %s238
          %s240 = smul.u32 %s239, 2
          %p241 = scmp.lt.s32.totalorder %s237, 0
          %s242 = scalar_select %p241, %s237, 0
          %s243 = smul.addr %s242, 2
          %s244 = smul.addr %s243, 8
          %s245 = scalar_lea.vmem %s0, %s244
          %s246 = ssub.s32 1, %s20
          %s247 = smul.u32 %s21, %s246
          %s248 = smul.u32 2, %s247
          %s249 = ssub.s32 1, %s248
          %s250 = smul.u32 128, %s249
          %s251 = smul.u32 %s250, 2
        $region40: #{tpu_custom_call.1} parent=35 // pred_fallthru
          _
      $region36: #{tpu_custom_call.1} parent=5 // pred_fallthru
        _
      %p252 = scmp.le.s32.totalorder 1, %s13
      %p253 = scmp.lt.s32.totalorder %s13, 3
      %p254 = pnand %p252, %p253
      %p255 = pneg %p254
      // Predicated region
      $region41: #{tpu_custom_call.1} parent=5 // pred_check
        _
      $region42: #{tpu_custom_call.1} parent=5 // pred_check_branch
        %257 = sbr.rel (%p254) target = $region44
      $region43: #{tpu_custom_call.1} parent=5 // pred_region
        %s258 = ssub.s32 %s13, 1
        // Predicated region
        $region45: #{tpu_custom_call.1} parent=43 // pred_check
          %p259 = pneg %p76
        $region46: #{tpu_custom_call.1} parent=43 // pred_check_branch
          %261 = sbr.rel (%p259) target = $region48
        $region47: #{tpu_custom_call.1} parent=43 // pred_region
          %262 = dma.done [#allocation8], 8192
        $region48: #{tpu_custom_call.1} parent=43 // pred_fallthru
          _
        %s263 = ssub.s32 1, %s22
        %s264 = smul.u32 %s23, %s263
        %s265 = smul.u32 2, %s264
        %s266 = ssub.s32 1, %s265
        %s267 = smul.u32 128, %s266
        %s268 = smul.u32 %s267, 2
        %p269 = scmp.lt.s32.totalorder %s265, 0
        %s270 = scalar_select %p269, %s265, 0
        %s271 = smul.addr %s270, 2
        %s272 = smul.addr %s271, 8
        %s273 = scalar_lea.vmem %s0, %s272
        %p274 = pneg %p55
        %p275 = pneg %p52
        %p276 = pneg %p76
        %p277 = pneg %p73
        %p278 = pneg %p97
        %p279 = pneg %p94
        %p280 = pneg %p118
        %p281 = pneg %p115
        %p282 = pneg %p139
        %p283 = pneg %p136
        %p284 = pneg %p160
        %p285 = pneg %p157
        %p286 = pneg %p188
        %p287 = pneg %p185
        %s288 = sand.u32 %s175, 1
        %s289 = sand.u32 %s175, 1
        %s290 = smul.addr %s289, 16
        %s291 = scalar_lea.vmem [#allocation9], %s290
        %s292 = ssub.s32 1, %s22
        %s293 = smul.u32 %s23, %s292
        %s294 = smul.u32 2, %s293
        %s295 = ssub.s32 1, %s294
        %s296 = smul.u32 128, %s295
        %s297 = smul.u32 %s296, 2
        %p298 = scmp.lt.s32.totalorder %s294, 0
        %s299 = scalar_select %p298, %s294, 0
        %s300 = smul.addr %s299, 2
        %s301 = smul.addr %s300, 8
        %s302 = scalar_lea.vmem %s0, %s301
        %s303 = ssub.s32 1, %s22
        %s304 = smul.u32 %s23, %s303
        %s305 = smul.u32 2, %s304
        %s306 = ssub.s32 1, %s305
        %s307 = smul.u32 128, %s306
        %s308 = smul.u32 %s307, 2
        %s309 = smul.u32 %s23, %s22
        %s310 = smul.u32 2, %s309
        %s311 = ssub.s32 1, %s310
        %s312 = smul.u32 128, %s311
        %p314 = scmp.eq.s32.totalorder %s22, 0
        %p315 = scmp.eq.s32.totalorder %s23, 0
        %p316 = pnand %p314, %p315
        %p317 = pneg %p316
        // Predicated region
        $region49: #{tpu_custom_call.1} parent=43 // pred_check
          _
        $region50: #{tpu_custom_call.1} parent=43 // pred_check_branch
          %319 = sbr.rel (%p316) target = $region52
        $region51: #{tpu_custom_call.1} parent=43 // pred_region
          %v320 = vlaneseq
          %vm321 = vcmp.ge.s32.totalorder %v320, 0
          %vm322 = vcmp.lt.s32.totalorder %v320, 512
          %vm323 = vmand %vm321, %vm322
          %324 = vst.msk [vmem:[#allocation3] sm:$0xf] %vm323, 0.0
          %325 = vst.msk [vmem:[#allocation4] sm:$0xf] %vm323, 0.0
        $region52: #{tpu_custom_call.1} parent=43 // pred_fallthru
          _
        // Predicated region
        $region53: #{tpu_custom_call.1} parent=43 // pred_check
          %p326 = pneg %p314
        $region54: #{tpu_custom_call.1} parent=43 // pred_check_branch
          %328 = sbr.rel (%p326) target = $region56
        $region55: #{tpu_custom_call.1} parent=43 // pred_region
          %v329 = vld [vmem:[%s302] sm:$0xff]
          %v330 = vld [vmem:[%s302 + $0x8] sm:$0xff]
          %v331 = vld [vmem:[%s302 + $0x10] sm:$0xff]
          %v332 = vld [vmem:[%s302 + $0x18] sm:$0xff]
          %v333 = vpack.c.bf16 %v331, %v329
          %v334 = vpack.c.bf16 %v332, %v330
          %v335 = vld [vmem:[#allocation7] sm:$0xff]
          %v336 = vld [vmem:[#allocation7 + $0x8] sm:$0xff]
          %v337 = vld [vmem:[#allocation7 + $0x10] sm:$0xff]
          %v338 = vld [vmem:[#allocation7 + $0x18] sm:$0xff]
          %v339 = vld [vmem:[#allocation7 + $0x20] sm:$0xff]
          %v340 = vld [vmem:[#allocation7 + $0x28] sm:$0xff]
          %v341 = vld [vmem:[#allocation7 + $0x30] sm:$0xff]
          %v342 = vld [vmem:[#allocation7 + $0x38] sm:$0xff]
          %v343 = vld [vmem:[#allocation7 + $0x40] sm:$0xff]
          %v344 = vld [vmem:[#allocation7 + $0x48] sm:$0xff]
          %v345 = vld [vmem:[#allocation7 + $0x50] sm:$0xff]
          %v346 = vld [vmem:[#allocation7 + $0x58] sm:$0xff]
          %v347 = vld [vmem:[#allocation7 + $0x60] sm:$0xff]
          %v348 = vld [vmem:[#allocation7 + $0x68] sm:$0xff]
          %v349 = vld [vmem:[#allocation7 + $0x70] sm:$0xff]
          %v350 = vld [vmem:[#allocation7 + $0x78] sm:$0xff]
          %v351 = vld [vmem:[#allocation7 + $0x80] sm:$0xff]
          %v352 = vld [vmem:[#allocation7 + $0x88] sm:$0xff]
          %v353 = vld [vmem:[#allocation7 + $0x90] sm:$0xff]
          %v354 = vld [vmem:[#allocation7 + $0x98] sm:$0xff]
          %v355 = vld [vmem:[#allocation7 + $0xa0] sm:$0xff]
          %v356 = vld [vmem:[#allocation7 + $0xa8] sm:$0xff]
          %v357 = vld [vmem:[#allocation7 + $0xb0] sm:$0xff]
          %v358 = vld [vmem:[#allocation7 + $0xb8] sm:$0xff]
          %v359 = vld [vmem:[#allocation7 + $0xc0] sm:$0xff]
          %v360 = vld [vmem:[#allocation7 + $0xc8] sm:$0xff]
          %v361 = vld [vmem:[#allocation7 + $0xd0] sm:$0xff]
          %v362 = vld [vmem:[#allocation7 + $0xd8] sm:$0xff]
          %v363 = vld [vmem:[#allocation7 + $0xe0] sm:$0xff]
          %v364 = vld [vmem:[#allocation7 + $0xe8] sm:$0xff]
          %v365 = vld [vmem:[#allocation7 + $0xf0] sm:$0xff]
          %v366 = vld [vmem:[#allocation7 + $0xf8] sm:$0xff]
          %v367 = vld [vmem:[#allocation7 + $0x100] sm:$0xff]
          %v368 = vld [vmem:[#allocation7 + $0x108] sm:$0xff]
          %v369 = vld [vmem:[#allocation7 + $0x110] sm:$0xff]
          %v370 = vld [vmem:[#allocation7 + $0x118] sm:$0xff]
          %v371 = vld [vmem:[#allocation7 + $0x120] sm:$0xff]
          %v372 = vld [vmem:[#allocation7 + $0x128] sm:$0xff]
          %v373 = vld [vmem:[#allocation7 + $0x130] sm:$0xff]
          %v374 = vld [vmem:[#allocation7 + $0x138] sm:$0xff]
          %v375 = vld [vmem:[#allocation7 + $0x140] sm:$0xff]
          %v376 = vld [vmem:[#allocation7 + $0x148] sm:$0xff]
          %v377 = vld [vmem:[#allocation7 + $0x150] sm:$0xff]
          %v378 = vld [vmem:[#allocation7 + $0x158] sm:$0xff]
          %v379 = vld [vmem:[#allocation7 + $0x160] sm:$0xff]
          %v380 = vld [vmem:[#allocation7 + $0x168] sm:$0xff]
          %v381 = vld [vmem:[#allocation7 + $0x170] sm:$0xff]
          %v382 = vld [vmem:[#allocation7 + $0x178] sm:$0xff]
          %v383 = vld [vmem:[#allocation7 + $0x180] sm:$0xff]
          %v384 = vld [vmem:[#allocation7 + $0x188] sm:$0xff]
          %v385 = vld [vmem:[#allocation7 + $0x190] sm:$0xff]
          %v386 = vld [vmem:[#allocation7 + $0x198] sm:$0xff]
          %v387 = vld [vmem:[#allocation7 + $0x1a0] sm:$0xff]
          %v388 = vld [vmem:[#allocation7 + $0x1a8] sm:$0xff]
          %v389 = vld [vmem:[#allocation7 + $0x1b0] sm:$0xff]
          %v390 = vld [vmem:[#allocation7 + $0x1b8] sm:$0xff]
          %v391 = vld [vmem:[#allocation7 + $0x1c0] sm:$0xff]
          %v392 = vld [vmem:[#allocation7 + $0x1c8] sm:$0xff]
          %v393 = vld [vmem:[#allocation7 + $0x1d0] sm:$0xff]
          %v394 = vld [vmem:[#allocation7 + $0x1d8] sm:$0xff]
          %v395 = vld [vmem:[#allocation7 + $0x1e0] sm:$0xff]
          %v396 = vld [vmem:[#allocation7 + $0x1e8] sm:$0xff]
          %v397 = vld [vmem:[#allocation7 + $0x1f0] sm:$0xff]
          %v398 = vld [vmem:[#allocation7 + $0x1f8] sm:$0xff]
          %v463 = vunpack.c.l.b16 %v335
          %v464 = vunpack.c.h.b16 %v335
          %v465 = vunpack.c.l.b16 %v336
          %v466 = vunpack.c.h.b16 %v336
          %v467 = vunpack.c.l.b16 %v337
          %v468 = vunpack.c.h.b16 %v337
          %v469 = vunpack.c.l.b16 %v338
          %v470 = vunpack.c.h.b16 %v338
          %v471 = vunpack.c.l.b16 %v339
          %v472 = vunpack.c.h.b16 %v339
          %v473 = vunpack.c.l.b16 %v340
          %v474 = vunpack.c.h.b16 %v340
          %v475 = vunpack.c.l.b16 %v341
          %v476 = vunpack.c.h.b16 %v341
          %v477 = vunpack.c.l.b16 %v342
          %v478 = vunpack.c.h.b16 %v342
          %v479 = vunpack.c.l.b16 %v343
          %v480 = vunpack.c.h.b16 %v343
          %v481 = vunpack.c.l.b16 %v344
          %v482 = vunpack.c.h.b16 %v344
          %v483 = vunpack.c.l.b16 %v345
          %v484 = vunpack.c.h.b16 %v345
          %v485 = vunpack.c.l.b16 %v346
          %v486 = vunpack.c.h.b16 %v346
          %v487 = vunpack.c.l.b16 %v347
          %v488 = vunpack.c.h.b16 %v347
          %v489 = vunpack.c.l.b16 %v348
          %v490 = vunpack.c.h.b16 %v348
          %v491 = vunpack.c.l.b16 %v349
          %v492 = vunpack.c.h.b16 %v349
          %v493 = vunpack.c.l.b16 %v350
          %v494 = vunpack.c.h.b16 %v350
          %v495 = vunpack.c.l.b16 %v351
          %v496 = vunpack.c.h.b16 %v351
          %v497 = vunpack.c.l.b16 %v352
          %v498 = vunpack.c.h.b16 %v352
          %v499 = vunpack.c.l.b16 %v353
          %v500 = vunpack.c.h.b16 %v353
          %v501 = vunpack.c.l.b16 %v354
          %v502 = vunpack.c.h.b16 %v354
          %v503 = vunpack.c.l.b16 %v355
          %v504 = vunpack.c.h.b16 %v355
          %v505 = vunpack.c.l.b16 %v356
          %v506 = vunpack.c.h.b16 %v356
          %v507 = vunpack.c.l.b16 %v357
          %v508 = vunpack.c.h.b16 %v357
          %v509 = vunpack.c.l.b16 %v358
          %v510 = vunpack.c.h.b16 %v358
          %v511 = vunpack.c.l.b16 %v359
          %v512 = vunpack.c.h.b16 %v359
          %v513 = vunpack.c.l.b16 %v360
          %v514 = vunpack.c.h.b16 %v360
          %v515 = vunpack.c.l.b16 %v361
          %v516 = vunpack.c.h.b16 %v361
          %v517 = vunpack.c.l.b16 %v362
          %v518 = vunpack.c.h.b16 %v362
          %v519 = vunpack.c.l.b16 %v363
          %v520 = vunpack.c.h.b16 %v363
          %v521 = vunpack.c.l.b16 %v364
          %v522 = vunpack.c.h.b16 %v364
          %v523 = vunpack.c.l.b16 %v365
          %v524 = vunpack.c.h.b16 %v365
          %v525 = vunpack.c.l.b16 %v366
          %v526 = vunpack.c.h.b16 %v366
          %v527 = vunpack.c.l.b16 %v367
          %v528 = vunpack.c.h.b16 %v367
          %v529 = vunpack.c.l.b16 %v368
          %v530 = vunpack.c.h.b16 %v368
          %v531 = vunpack.c.l.b16 %v369
          %v532 = vunpack.c.h.b16 %v369
          %v533 = vunpack.c.l.b16 %v370
          %v534 = vunpack.c.h.b16 %v370
          %v535 = vunpack.c.l.b16 %v371
          %v536 = vunpack.c.h.b16 %v371
          %v537 = vunpack.c.l.b16 %v372
          %v538 = vunpack.c.h.b16 %v372
          %v539 = vunpack.c.l.b16 %v373
          %v540 = vunpack.c.h.b16 %v373
          %v541 = vunpack.c.l.b16 %v374
          %v542 = vunpack.c.h.b16 %v374
          %v543 = vunpack.c.l.b16 %v375
          %v544 = vunpack.c.h.b16 %v375
          %v545 = vunpack.c.l.b16 %v376
          %v546 = vunpack.c.h.b16 %v376
          %v547 = vunpack.c.l.b16 %v377
          %v548 = vunpack.c.h.b16 %v377
          %v549 = vunpack.c.l.b16 %v378
          %v550 = vunpack.c.h.b16 %v378
          %v551 = vunpack.c.l.b16 %v379
          %v552 = vunpack.c.h.b16 %v379
          %v553 = vunpack.c.l.b16 %v380
          %v554 = vunpack.c.h.b16 %v380
          %v555 = vunpack.c.l.b16 %v381
          %v556 = vunpack.c.h.b16 %v381
          %v557 = vunpack.c.l.b16 %v382
          %v558 = vunpack.c.h.b16 %v382
          %v559 = vunpack.c.l.b16 %v383
          %v560 = vunpack.c.h.b16 %v383
          %v561 = vunpack.c.l.b16 %v384
          %v562 = vunpack.c.h.b16 %v384
          %v563 = vunpack.c.l.b16 %v385
          %v564 = vunpack.c.h.b16 %v385
          %v565 = vunpack.c.l.b16 %v386
          %v566 = vunpack.c.h.b16 %v386
          %v567 = vunpack.c.l.b16 %v387
          %v568 = vunpack.c.h.b16 %v387
          %v569 = vunpack.c.l.b16 %v388
          %v570 = vunpack.c.h.b16 %v388
          %v571 = vunpack.c.l.b16 %v389
          %v572 = vunpack.c.h.b16 %v389
          %v573 = vunpack.c.l.b16 %v390
          %v574 = vunpack.c.h.b16 %v390
          %v575 = vunpack.c.l.b16 %v391
          %v576 = vunpack.c.h.b16 %v391
          %v577 = vunpack.c.l.b16 %v392
          %v578 = vunpack.c.h.b16 %v392
          %v579 = vunpack.c.l.b16 %v393
          %v580 = vunpack.c.h.b16 %v393
          %v581 = vunpack.c.l.b16 %v394
          %v582 = vunpack.c.h.b16 %v394
          %v583 = vunpack.c.l.b16 %v395
          %v584 = vunpack.c.h.b16 %v395
          %v585 = vunpack.c.l.b16 %v396
          %v586 = vunpack.c.h.b16 %v396
          %v587 = vunpack.c.l.b16 %v397
          %v588 = vunpack.c.h.b16 %v397
          %v589 = vunpack.c.l.b16 %v398
          %v590 = vunpack.c.h.b16 %v398
          %v591 = vpack.c.b16 %v467, %v463
          %v592 = vpack.c.b16 %v468, %v464
          %v593 = vpack.c.b16 %v469, %v465
          %v594 = vpack.c.b16 %v470, %v466
          %v595 = vpack.c.b16 %v475, %v471
          %v596 = vpack.c.b16 %v476, %v472
          %v597 = vpack.c.b16 %v477, %v473
          %v598 = vpack.c.b16 %v478, %v474
          %v599 = vpack.c.b16 %v483, %v479
          %v600 = vpack.c.b16 %v484, %v480
          %v601 = vpack.c.b16 %v485, %v481
          %v602 = vpack.c.b16 %v486, %v482
          %v603 = vpack.c.b16 %v491, %v487
          %v604 = vpack.c.b16 %v492, %v488
          %v605 = vpack.c.b16 %v493, %v489
          %v606 = vpack.c.b16 %v494, %v490
          %v607 = vpack.c.b16 %v499, %v495
          %v608 = vpack.c.b16 %v500, %v496
          %v609 = vpack.c.b16 %v501, %v497
          %v610 = vpack.c.b16 %v502, %v498
          %v611 = vpack.c.b16 %v507, %v503
          %v612 = vpack.c.b16 %v508, %v504
          %v613 = vpack.c.b16 %v509, %v505
          %v614 = vpack.c.b16 %v510, %v506
          %v615 = vpack.c.b16 %v515, %v511
          %v616 = vpack.c.b16 %v516, %v512
          %v617 = vpack.c.b16 %v517, %v513
          %v618 = vpack.c.b16 %v518, %v514
          %v619 = vpack.c.b16 %v523, %v519
          %v620 = vpack.c.b16 %v524, %v520
          %v621 = vpack.c.b16 %v525, %v521
          %v622 = vpack.c.b16 %v526, %v522
          %v623 = vpack.c.b16 %v531, %v527
          %v624 = vpack.c.b16 %v532, %v528
          %v625 = vpack.c.b16 %v533, %v529
          %v626 = vpack.c.b16 %v534, %v530
          %v627 = vpack.c.b16 %v539, %v535
          %v628 = vpack.c.b16 %v540, %v536
          %v629 = vpack.c.b16 %v541, %v537
          %v630 = vpack.c.b16 %v542, %v538
          %v631 = vpack.c.b16 %v547, %v543
          %v632 = vpack.c.b16 %v548, %v544
          %v633 = vpack.c.b16 %v549, %v545
          %v634 = vpack.c.b16 %v550, %v546
          %v635 = vpack.c.b16 %v555, %v551
          %v636 = vpack.c.b16 %v556, %v552
          %v637 = vpack.c.b16 %v557, %v553
          %v638 = vpack.c.b16 %v558, %v554
          %v639 = vpack.c.b16 %v563, %v559
          %v640 = vpack.c.b16 %v564, %v560
          %v641 = vpack.c.b16 %v565, %v561
          %v642 = vpack.c.b16 %v566, %v562
          %v643 = vpack.c.b16 %v571, %v567
          %v644 = vpack.c.b16 %v572, %v568
          %v645 = vpack.c.b16 %v573, %v569
          %v646 = vpack.c.b16 %v574, %v570
          %v647 = vpack.c.b16 %v579, %v575
          %v648 = vpack.c.b16 %v580, %v576
          %v649 = vpack.c.b16 %v581, %v577
          %v650 = vpack.c.b16 %v582, %v578
          %v651 = vpack.c.b16 %v587, %v583
          %v652 = vpack.c.b16 %v588, %v584
          %v653 = vpack.c.b16 %v589, %v585
          %v654 = vpack.c.b16 %v590, %v586
          %719 = vmatprep.subr.bf16.mxu0 %v592
          %720 = vmatpush1.bf16.msra.mxu0 %v591
          %721 = vmatprep.subr.bf16.mxu0 %v596
          %722 = vmatpush1.bf16.msra.mxu0 %v595
          %723 = vmatprep.subr.bf16.mxu0 %v600
          %724 = vmatpush1.bf16.msra.mxu0 %v599
          %725 = vmatprep.subr.bf16.mxu0 %v604
          %726 = vmatpush1.bf16.msra.mxu0 %v603
          %727 = vmatprep.subr.bf16.mxu0 %v608
          %728 = vmatpush1.bf16.msra.mxu0 %v607
          %729 = vmatprep.subr.bf16.mxu0 %v612
          %730 = vmatpush1.bf16.msra.mxu0 %v611
          %731 = vmatprep.subr.bf16.mxu0 %v616
          %732 = vmatpush1.bf16.msra.mxu0 %v615
          %733 = vmatprep.subr.bf16.mxu0 %v620
          %734 = vmatpush1.bf16.msra.mxu0 %v619
          %735 = vmatprep.subr.bf16.mxu0 %v624
          %736 = vmatpush1.bf16.msra.mxu0 %v623
          %737 = vmatprep.subr.bf16.mxu0 %v628
          %738 = vmatpush1.bf16.msra.mxu0 %v627
          %739 = vmatprep.subr.bf16.mxu0 %v632
          %740 = vmatpush1.bf16.msra.mxu0 %v631
          %741 = vmatprep.subr.bf16.mxu0 %v636
          %742 = vmatpush1.bf16.msra.mxu0 %v635
          %743 = vmatprep.subr.bf16.mxu0 %v640
          %744 = vmatpush1.bf16.msra.mxu0 %v639
          %745 = vmatprep.subr.bf16.mxu0 %v644
          %746 = vmatpush1.bf16.msra.mxu0 %v643
          %747 = vmatprep.subr.bf16.mxu0 %v648
          %748 = vmatpush1.bf16.msra.mxu0 %v647
          %749 = vmatprep.subr.bf16.mxu0 %v652
          %750 = vmatpush1.bf16.msra.mxu0 %v651
          %751 = vmatprep.mubr.bf16.mxu0 %v334
          %752 = vmatmul.mubr.bf16.gmra.mrb[0].mxu0 %v333
          %v753 = vpop.f32.mrb[0].mxu0
          %v754 = vadd.f32 0.0, %v753
          %v755 = vpop.f32.mrb[0].mxu0
          %v756 = vadd.f32 0.0, %v755
          %v757 = vpop.f32.mrb[0].mxu0
          %v758 = vadd.f32 0.0, %v757
          %v759 = vpop.f32.mrb[0].mxu0
          %v760 = vadd.f32 0.0, %v759
          %761 = vdwg.mxu0
          %762 = vmatprep.subr.bf16.mxu0 %v594
          %763 = vmatpush1.bf16.msra.mxu0 %v593
          %764 = vmatprep.subr.bf16.mxu0 %v598
          %765 = vmatpush1.bf16.msra.mxu0 %v597
          %766 = vmatprep.subr.bf16.mxu0 %v602
          %767 = vmatpush1.bf16.msra.mxu0 %v601
          %768 = vmatprep.subr.bf16.mxu0 %v606
          %769 = vmatpush1.bf16.msra.mxu0 %v605
          %770 = vmatprep.subr.bf16.mxu0 %v610
          %771 = vmatpush1.bf16.msra.mxu0 %v609
          %772 = vmatprep.subr.bf16.mxu0 %v614
          %773 = vmatpush1.bf16.msra.mxu0 %v613
          %774 = vmatprep.subr.bf16.mxu0 %v618
          %775 = vmatpush1.bf16.msra.mxu0 %v617
          %776 = vmatprep.subr.bf16.mxu0 %v622
          %777 = vmatpush1.bf16.msra.mxu0 %v621
          %778 = vmatprep.subr.bf16.mxu0 %v626
          %779 = vmatpush1.bf16.msra.mxu0 %v625
          %780 = vmatprep.subr.bf16.mxu0 %v630
          %781 = vmatpush1.bf16.msra.mxu0 %v629
          %782 = vmatprep.subr.bf16.mxu0 %v634
          %783 = vmatpush1.bf16.msra.mxu0 %v633
          %784 = vmatprep.subr.bf16.mxu0 %v638
          %785 = vmatpush1.bf16.msra.mxu0 %v637
          %786 = vmatprep.subr.bf16.mxu0 %v642
          %787 = vmatpush1.bf16.msra.mxu0 %v641
          %788 = vmatprep.subr.bf16.mxu0 %v646
          %789 = vmatpush1.bf16.msra.mxu0 %v645
          %790 = vmatprep.subr.bf16.mxu0 %v650
          %791 = vmatpush1.bf16.msra.mxu0 %v649
          %792 = vmatprep.subr.bf16.mxu0 %v654
          %793 = vmatpush1.bf16.msra.mxu0 %v653
          %794 = vmatprep.mubr.bf16.mxu0 %v334
          %795 = vmatmul.mubr.bf16.gmra.mrb[0].mxu0 %v333
          %v796 = vpop.f32.mrb[0].mxu0
          %v797 = vadd.f32 0.0, %v796
          %v798 = vpop.f32.mrb[0].mxu0
          %v799 = vadd.f32 0.0, %v798
          %v800 = vpop.f32.mrb[0].mxu0
          %v801 = vadd.f32 0.0, %v800
          %v802 = vpop.f32.mrb[0].mxu0
          %v803 = vadd.f32 0.0, %v802
          %804 = vdwg.mxu0
          %s805 = smul.u32 %s23, 8
          %s806 = smul.addr %s805, 8
          %s807 = scalar_lea.vmem [#allocation2], %s806
          %808 = vst [vmem:[%s807] sm:$0xff] %v754
          %809 = vst [vmem:[%s807 + $0x8] sm:$0xff] %v756
          %810 = vst [vmem:[%s807 + $0x10] sm:$0xff] %v797
          %811 = vst [vmem:[%s807 + $0x18] sm:$0xff] %v799
          %812 = vst [vmem:[%s807 + $0x20] sm:$0xff] %v758
          %813 = vst [vmem:[%s807 + $0x28] sm:$0xff] %v760
          %814 = vst [vmem:[%s807 + $0x30] sm:$0xff] %v801
          %815 = vst [vmem:[%s807 + $0x38] sm:$0xff] %v803
          %p816 = scmp.lt.s32.totalorder %s23, 0
          // Predicated region
          $region57: #{tpu_custom_call.1} parent=55 // pred_check
            %p817 = pneg %p816
          $region58: #{tpu_custom_call.1} parent=55 // pred_check_branch
            %819 = sbr.rel (%p817) target = $region60
          $region59: #{tpu_custom_call.1} parent=55 // pred_region
            %v820 = vld [vmem:[#allocation3] sm:$0xf]
            %v821 = vadd.f32 %v754, %v758
            %v822 = vrot.slane %v821, 4
            %v823 = vadd.f32 %v821, %v822
            %v824 = vrot.slane %v823, 2
            %v825 = vadd.f32 %v823, %v824
            %v826 = vrot.slane %v825, 1
            %v827 = vadd.f32 %v825, %v826
            %v828 = vadd.f32 %v756, %v760
            %v829 = vrot.slane %v828, 4
            %v830 = vadd.f32 %v828, %v829
            %v831 = vrot.slane %v830, 2
            %v832 = vadd.f32 %v830, %v831
            %v833 = vrot.slane %v832, 1
            %v834 = vadd.f32 %v832, %v833
            %v835 = vadd.f32 %v797, %v801
            %v836 = vrot.slane %v835, 4
            %v837 = vadd.f32 %v835, %v836
            %v838 = vrot.slane %v837, 2
            %v839 = vadd.f32 %v837, %v838
            %v840 = vrot.slane %v839, 1
            %v841 = vadd.f32 %v839, %v840
            %v842 = vadd.f32 %v799, %v803
            %v843 = vrot.slane %v842, 4
            %v844 = vadd.f32 %v842, %v843
            %v845 = vrot.slane %v844, 2
            %v846 = vadd.f32 %v844, %v845
            %v847 = vrot.slane %v846, 1
            %v848 = vadd.f32 %v846, %v847
            %v853 = vcombine.low %v827, %v834
            %v854 = vcombine.low %v841, %v848
            %v856 = vunpack.c.l.s4 1966171168
            %v857 = vunpack.c.0.s8 %v856
            %v858 = vlaneseq
            %v859 = vshrl.u32 %v858, 7
            %v860 = vsub.s32 %v857, %v859
            %v861 = vrot.slane %v853, %v860
            %v863 = vunpack.c.l.s4 1966171168
            %v864 = vunpack.c.0.s8 %v863
            %v865 = vlaneseq
            %v866 = vshrl.u32 %v865, 7
            %v867 = vsub.s32 %v864, %v866
            %v868 = vrot.slane %v854, %v867
            %v869 = vcombine.low %v861, %v868
            %v871 = vunpack.c.l.s4 1966171168
            %v872 = vunpack.c.0.s8 %v871
            %v873 = vlaneseq
            %v874 = vshrl.u32 %v873, 7
            %v875 = vsub.s32 %v872, %v874
            %v876 = vrot.slane %v869, %v875
            %v878 = vadd.f32 %v820, %v876
            %v879 = vlaneseq
            %vm880 = vcmp.ge.s32.totalorder %v879, 0
            %vm881 = vcmp.lt.s32.totalorder %v879, 512
            %vm882 = vmand %vm880, %vm881
            %883 = vst.msk [vmem:[#allocation3] sm:$0xf] %vm882, %v878
            %v884 = vld [vmem:[#allocation4] sm:$0xf]
            %v885 = vmul.f32 %v754, %v754
            %v886 = vmul.f32 %v756, %v756
            %v887 = vmul.f32 %v797, %v797
            %v888 = vmul.f32 %v799, %v799
            %v889 = vmul.f32 %v758, %v758
            %v890 = vmul.f32 %v760, %v760
            %v891 = vmul.f32 %v801, %v801
            %v892 = vmul.f32 %v803, %v803
            %v893 = vadd.f32 %v885, %v889
            %v894 = vrot.slane %v893, 4
            %v895 = vadd.f32 %v893, %v894
            %v896 = vrot.slane %v895, 2
            %v897 = vadd.f32 %v895, %v896
            %v898 = vrot.slane %v897, 1
            %v899 = vadd.f32 %v897, %v898
            %v900 = vadd.f32 %v886, %v890
            %v901 = vrot.slane %v900, 4
            %v902 = vadd.f32 %v900, %v901
            %v903 = vrot.slane %v902, 2
            %v904 = vadd.f32 %v902, %v903
            %v905 = vrot.slane %v904, 1
            %v906 = vadd.f32 %v904, %v905
            %v907 = vadd.f32 %v887, %v891
            %v908 = vrot.slane %v907, 4
            %v909 = vadd.f32 %v907, %v908
            %v910 = vrot.slane %v909, 2
            %v911 = vadd.f32 %v909, %v910
            %v912 = vrot.slane %v911, 1
            %v913 = vadd.f32 %v911, %v912
            %v914 = vadd.f32 %v888, %v892
            %v915 = vrot.slane %v914, 4
            %v916 = vadd.f32 %v914, %v915
            %v917 = vrot.slane %v916, 2
            %v918 = vadd.f32 %v916, %v917
            %v919 = vrot.slane %v918, 1
            %v920 = vadd.f32 %v918, %v919
            %v925 = vcombine.low %v899, %v906
            %v926 = vcombine.low %v913, %v920
            %v928 = vunpack.c.l.s4 1966171168
            %v929 = vunpack.c.0.s8 %v928
            %v930 = vlaneseq
            %v931 = vshrl.u32 %v930, 7
            %v932 = vsub.s32 %v929, %v931
            %v933 = vrot.slane %v925, %v932
            %v935 = vunpack.c.l.s4 1966171168
            %v936 = vunpack.c.0.s8 %v935
            %v937 = vlaneseq
            %v938 = vshrl.u32 %v937, 7
            %v939 = vsub.s32 %v936, %v938
            %v940 = vrot.slane %v926, %v939
            %v941 = vcombine.low %v933, %v940
            %v943 = vunpack.c.l.s4 1966171168
            %v944 = vunpack.c.0.s8 %v943
            %v945 = vlaneseq
            %v946 = vshrl.u32 %v945, 7
            %v947 = vsub.s32 %v944, %v946
            %v948 = vrot.slane %v941, %v947
            %v950 = vadd.f32 %v884, %v948
            %951 = vst.msk [vmem:[#allocation4] sm:$0xf] %vm882, %v950
          $region60: #{tpu_custom_call.1} parent=55 // pred_fallthru
            _
          // Predicated region
          $region61: #{tpu_custom_call.1} parent=55 // pred_check
            %p952 = pneg %p315
          $region62: #{tpu_custom_call.1} parent=55 // pred_check_branch
            %954 = sbr.rel (%p952) target = $region64
          $region63: #{tpu_custom_call.1} parent=55 // pred_region
            %v955 = vlaneseq
            %v956 = vshrl.u32 %v955, 7
            %v957 = vadd.s32 %v956, 8
            %vm958 = vcmp.lt.s32.totalorder %v956, 8
            %vm959 = vcmp.lt.s32.totalorder %v957, 8
            %v960 = vsel %vm958, 1, 0
            %v961 = vsel %vm959, 1, 0
            %vm962 = vcmp.eq.s32.totalorder %v960, 1
            %vm963 = vcmp.eq.s32.totalorder %v961, 1
            %v964 = vsel %vm962, %v754, 0.0
            %v965 = vsel %vm962, %v756, 0.0
            %v966 = vsel %vm962, %v797, 0.0
            %v967 = vsel %vm962, %v799, 0.0
            %v968 = vsel %vm963, %v758, 0.0
            %v969 = vsel %vm963, %v760, 0.0
            %v970 = vsel %vm963, %v801, 0.0
            %v971 = vsel %vm963, %v803, 0.0
            %v972 = vld [vmem:[#allocation3] sm:$0xf]
            %v973 = vadd.f32 %v964, %v968
            %v974 = vrot.slane %v973, 4
            %v975 = vadd.f32 %v973, %v974
            %v976 = vrot.slane %v975, 2
            %v977 = vadd.f32 %v975, %v976
            %v978 = vrot.slane %v977, 1
            %v979 = vadd.f32 %v977, %v978
            %v980 = vadd.f32 %v965, %v969
            %v981 = vrot.slane %v980, 4
            %v982 = vadd.f32 %v980, %v981
            %v983 = vrot.slane %v982, 2
            %v984 = vadd.f32 %v982, %v983
            %v985 = vrot.slane %v984, 1
            %v986 = vadd.f32 %v984, %v985
            %v987 = vadd.f32 %v966, %v970
            %v988 = vrot.slane %v987, 4
            %v989 = vadd.f32 %v987, %v988
            %v990 = vrot.slane %v989, 2
            %v991 = vadd.f32 %v989, %v990
            %v992 = vrot.slane %v991, 1
            %v993 = vadd.f32 %v991, %v992
            %v994 = vadd.f32 %v967, %v971
            %v995 = vrot.slane %v994, 4
            %v996 = vadd.f32 %v994, %v995
            %v997 = vrot.slane %v996, 2
            %v998 = vadd.f32 %v996, %v997
            %v999 = vrot.slane %v998, 1
            %v1000 = vadd.f32 %v998, %v999
            %v1005 = vcombine.low %v979, %v986
            %v1006 = vcombine.low %v993, %v1000
            %v1008 = vunpack.c.l.s4 1966171168
            %v1009 = vunpack.c.0.s8 %v1008
            %v1010 = vlaneseq
            %v1011 = vshrl.u32 %v1010, 7
            %v1012 = vsub.s32 %v1009, %v1011
            %v1013 = vrot.slane %v1005, %v1012
            %v1015 = vunpack.c.l.s4 1966171168
            %v1016 = vunpack.c.0.s8 %v1015
            %v1017 = vlaneseq
            %v1018 = vshrl.u32 %v1017, 7
            %v1019 = vsub.s32 %v1016, %v1018
            %v1020 = vrot.slane %v1006, %v1019
            %v1021 = vcombine.low %v1013, %v1020
            %v1023 = vunpack.c.l.s4 1966171168
            %v1024 = vunpack.c.0.s8 %v1023
            %v1025 = vlaneseq
            %v1026 = vshrl.u32 %v1025, 7
            %v1027 = vsub.s32 %v1024, %v1026
            %v1028 = vrot.slane %v1021, %v1027
            %v1030 = vadd.f32 %v972, %v1028
            %v1031 = vlaneseq
            %vm1032 = vcmp.ge.s32.totalorder %v1031, 0
            %vm1033 = vcmp.lt.s32.totalorder %v1031, 512
            %vm1034 = vmand %vm1032, %vm1033
            %1035 = vst.msk [vmem:[#allocation3] sm:$0xf] %vm1034, %v1030
            %v1036 = vld [vmem:[#allocation4] sm:$0xf]
            %v1037 = vmul.f32 %v964, %v964
            %v1038 = vmul.f32 %v965, %v965
            %v1039 = vmul.f32 %v966, %v966
            %v1040 = vmul.f32 %v967, %v967
            %v1041 = vmul.f32 %v968, %v968
            %v1042 = vmul.f32 %v969, %v969
            %v1043 = vmul.f32 %v970, %v970
            %v1044 = vmul.f32 %v971, %v971
            %v1045 = vadd.f32 %v1037, %v1041
            %v1046 = vrot.slane %v1045, 4
            %v1047 = vadd.f32 %v1045, %v1046
            %v1048 = vrot.slane %v1047, 2
            %v1049 = vadd.f32 %v1047, %v1048
            %v1050 = vrot.slane %v1049, 1
            %v1051 = vadd.f32 %v1049, %v1050
            %v1052 = vadd.f32 %v1038, %v1042
            %v1053 = vrot.slane %v1052, 4
            %v1054 = vadd.f32 %v1052, %v1053
            %v1055 = vrot.slane %v1054, 2
            %v1056 = vadd.f32 %v1054, %v1055
            %v1057 = vrot.slane %v1056, 1
            %v1058 = vadd.f32 %v1056, %v1057
            %v1059 = vadd.f32 %v1039, %v1043
            %v1060 = vrot.slane %v1059, 4
            %v1061 = vadd.f32 %v1059, %v1060
            %v1062 = vrot.slane %v1061, 2
            %v1063 = vadd.f32 %v1061, %v1062
            %v1064 = vrot.slane %v1063, 1
            %v1065 = vadd.f32 %v1063, %v1064
            %v1066 = vadd.f32 %v1040, %v1044
            %v1067 = vrot.slane %v1066, 4
            %v1068 = vadd.f32 %v1066, %v1067
            %v1069 = vrot.slane %v1068, 2
            %v1070 = vadd.f32 %v1068, %v1069
            %v1071 = vrot.slane %v1070, 1
            %v1072 = vadd.f32 %v1070, %v1071
            %v1077 = vcombine.low %v1051, %v1058
            %v1078 = vcombine.low %v1065, %v1072
            %v1080 = vunpack.c.l.s4 1966171168
            %v1081 = vunpack.c.0.s8 %v1080
            %v1082 = vlaneseq
            %v1083 = vshrl.u32 %v1082, 7
            %v1084 = vsub.s32 %v1081, %v1083
            %v1085 = vrot.slane %v1077, %v1084
            %v1087 = vunpack.c.l.s4 1966171168
            %v1088 = vunpack.c.0.s8 %v1087
            %v1089 = vlaneseq
            %v1090 = vshrl.u32 %v1089, 7
            %v1091 = vsub.s32 %v1088, %v1090
            %v1092 = vrot.slane %v1078, %v1091
            %v1093 = vcombine.low %v1085, %v1092
            %v1095 = vunpack.c.l.s4 1966171168
            %v1096 = vunpack.c.0.s8 %v1095
            %v1097 = vlaneseq
            %v1098 = vshrl.u32 %v1097, 7
            %v1099 = vsub.s32 %v1096, %v1098
            %v1100 = vrot.slane %v1093, %v1099
            %v1102 = vadd.f32 %v1036, %v1100
            %1103 = vst.msk [vmem:[#allocation4] sm:$0xf] %vm1034, %v1102
          $region64: #{tpu_custom_call.1} parent=55 // pred_fallthru
            _
        $region56: #{tpu_custom_call.1} parent=43 // pred_fallthru
          _
        %p1104 = scmp.eq.s32.totalorder %s22, 1
        // Predicated region
        $region65: #{tpu_custom_call.1} parent=43 // pred_check
          %p1105 = pneg %p1104
        $region66: #{tpu_custom_call.1} parent=43 // pred_check_branch
          %1107 = sbr.rel (%p1105) target = $region68
        $region67: #{tpu_custom_call.1} parent=43 // pred_region
          // Predicated region
          $region69: #{tpu_custom_call.1} parent=67 // pred_check
            %p1108 = pneg %p315
          $region70: #{tpu_custom_call.1} parent=67 // pred_check_branch
            %1110 = sbr.rel (%p1108) target = $region72
          $region71: #{tpu_custom_call.1} parent=67 // pred_region
            %v1111 = vld [vmem:[#allocation3] sm:$0xf]
            %v1112 = vmul.f32 %v1111, 0.125
            %v1113 = vld [vmem:[#allocation4] sm:$0xf]
            %v1114 = vmul.f32 %v1113, 0.125
            %v1115 = vmul.f32 %v1112, %v1112
            %v1116 = vsub.f32 %v1114, %v1115
            %v1117 = vmax.f32 %v1116, 0.0
            %v1118 = vld [vmem:[%s2] sm:$0xf]
            %v1119 = vadd.f32 %v1117, 1e-05
            %v1120 = vrsqrt.pop %v1119
            %v1121 = vmul.f32 %v1118, %v1120
            %v1122 = vlaneseq
            %vm1123 = vcmp.ge.s32.totalorder %v1122, 0
            %vm1124 = vcmp.lt.s32.totalorder %v1122, 512
            %vm1125 = vmand %vm1123, %vm1124
            %1126 = vst.msk [vmem:[#allocation5] sm:$0xf] %vm1125, %v1121
            %v1127 = vld [vmem:[%s3] sm:$0xf]
            %v1128 = vmul.f32 %v1112, %v1121
            %v1129 = vsub.f32 %v1127, %v1128
            %1130 = vst.msk [vmem:[#allocation6] sm:$0xf] %vm1125, %v1129
          $region72: #{tpu_custom_call.1} parent=67 // pred_fallthru
            _
          %s1131 = smul.u32 %s23, 8
          %s1132 = smul.addr %s1131, 8
          %s1133 = scalar_lea.vmem [#allocation2], %s1132
          %v1134 = vld [vmem:[%s1133] sm:$0xff]
          %v1135 = vld [vmem:[%s1133 + $0x8] sm:$0xff]
          %v1136 = vld [vmem:[%s1133 + $0x10] sm:$0xff]
          %v1137 = vld [vmem:[%s1133 + $0x18] sm:$0xff]
          %v1138 = vld [vmem:[%s1133 + $0x20] sm:$0xff]
          %v1139 = vld [vmem:[%s1133 + $0x28] sm:$0xff]
          %v1140 = vld [vmem:[%s1133 + $0x30] sm:$0xff]
          %v1141 = vld [vmem:[%s1133 + $0x38] sm:$0xff]
          %v1142 = vld [vmem:[#allocation5] sm:$0xf]
          %v1144 = vlaneseq
          %v1145 = vshrl.u32 %v1144, 7
          %v1146 = vsub.s32 0, %v1145
          %v1147 = vrot.slane %v1142, %v1146
          %v1148 = vlaneseq
          %v1149 = vshrl.u32 %v1148, 7
          %v1150 = vsub.s32 1, %v1149
          %v1151 = vrot.slane %v1142, %v1150
          %v1152 = vlaneseq
          %v1153 = vshrl.u32 %v1152, 7
          %v1154 = vsub.s32 2, %v1153
          %v1155 = vrot.slane %v1142, %v1154
          %v1156 = vlaneseq
          %v1157 = vshrl.u32 %v1156, 7
          %v1158 = vsub.s32 3, %v1157
          %v1159 = vrot.slane %v1142, %v1158
          %v1164 = vmul.f32 %v1134, %v1147
          %v1165 = vmul.f32 %v1135, %v1151
          %v1166 = vmul.f32 %v1136, %v1155
          %v1167 = vmul.f32 %v1137, %v1159
          %v1168 = vmul.f32 %v1138, %v1147
          %v1169 = vmul.f32 %v1139, %v1151
          %v1170 = vmul.f32 %v1140, %v1155
          %v1171 = vmul.f32 %v1141, %v1159
          %v1172 = vld [vmem:[#allocation6] sm:$0xf]
          %v1174 = vlaneseq
          %v1175 = vshrl.u32 %v1174, 7
          %v1176 = vsub.s32 0, %v1175
          %v1177 = vrot.slane %v1172, %v1176
          %v1178 = vlaneseq
          %v1179 = vshrl.u32 %v1178, 7
          %v1180 = vsub.s32 1, %v1179
          %v1181 = vrot.slane %v1172, %v1180
          %v1182 = vlaneseq
          %v1183 = vshrl.u32 %v1182, 7
          %v1184 = vsub.s32 2, %v1183
          %v1185 = vrot.slane %v1172, %v1184
          %v1186 = vlaneseq
          %v1187 = vshrl.u32 %v1186, 7
          %v1188 = vsub.s32 3, %v1187
          %v1189 = vrot.slane %v1172, %v1188
          %v1194 = vadd.f32 %v1164, %v1177
          %v1195 = vadd.f32 %v1165, %v1181
          %v1196 = vadd.f32 %v1166, %v1185
          %v1197 = vadd.f32 %v1167, %v1189
          %v1198 = vadd.f32 %v1168, %v1177
          %v1199 = vadd.f32 %v1169, %v1181
          %v1200 = vadd.f32 %v1170, %v1185
          %v1201 = vadd.f32 %v1171, %v1189
          %v1202 = vmul.f32 %v1194, 0.01
          %v1203 = vmul.f32 %v1195, 0.01
          %v1204 = vmul.f32 %v1196, 0.01
          %v1205 = vmul.f32 %v1197, 0.01
          %v1206 = vmul.f32 %v1198, 0.01
          %v1207 = vmul.f32 %v1199, 0.01
          %v1208 = vmul.f32 %v1200, 0.01
          %v1209 = vmul.f32 %v1201, 0.01
          %v1210 = vmax.f32 %v1194, %v1202
          %v1211 = vmax.f32 %v1195, %v1203
          %v1212 = vmax.f32 %v1196, %v1204
          %v1213 = vmax.f32 %v1197, %v1205
          %v1214 = vmax.f32 %v1198, %v1206
          %v1215 = vmax.f32 %v1199, %v1207
          %v1216 = vmax.f32 %v1200, %v1208
          %v1217 = vmax.f32 %v1201, %v1209
          %v1218 = vpack.c.bf16 %v1214, %v1210
          %v1219 = vpack.c.bf16 %v1215, %v1211
          %v1220 = vpack.c.bf16 %v1216, %v1212
          %v1221 = vpack.c.bf16 %v1217, %v1213
          %v1222 = vld [vmem:[%s4] sm:$0xf]
          %v1223 = vld [vmem:[%s4 + $0x4] sm:$0xf]
          %v1224 = vld [vmem:[%s4 + $0x8] sm:$0xf]
          %v1225 = vld [vmem:[%s4 + $0xc] sm:$0xf]
          %v1226 = vld [vmem:[%s4 + $0x10] sm:$0xf]
          %v1227 = vld [vmem:[%s4 + $0x14] sm:$0xf]
          %v1228 = vld [vmem:[%s4 + $0x18] sm:$0xf]
          %v1229 = vld [vmem:[%s4 + $0x1c] sm:$0xf]
          %v1230 = vld [vmem:[%s4 + $0x20] sm:$0xf]
          %v1231 = vld [vmem:[%s4 + $0x24] sm:$0xf]
          %v1232 = vld [vmem:[%s4 + $0x28] sm:$0xf]
          %v1233 = vld [vmem:[%s4 + $0x2c] sm:$0xf]
          %v1234 = vld [vmem:[%s4 + $0x30] sm:$0xf]
          %v1235 = vld [vmem:[%s4 + $0x34] sm:$0xf]
          %v1236 = vld [vmem:[%s4 + $0x38] sm:$0xf]
          %v1237 = vld [vmem:[%s4 + $0x3c] sm:$0xf]
          %v1238 = vld [vmem:[%s4 + $0x40] sm:$0xf]
          %v1239 = vld [vmem:[%s4 + $0x44] sm:$0xf]
          %v1240 = vld [vmem:[%s4 + $0x48] sm:$0xf]
          %v1241 = vld [vmem:[%s4 + $0x4c] sm:$0xf]
          %v1242 = vld [vmem:[%s4 + $0x50] sm:$0xf]
          %v1243 = vld [vmem:[%s4 + $0x54] sm:$0xf]
          %v1244 = vld [vmem:[%s4 + $0x58] sm:$0xf]
          %v1245 = vld [vmem:[%s4 + $0x5c] sm:$0xf]
          %v1246 = vld [vmem:[%s4 + $0x60] sm:$0xf]
          %v1247 = vld [vmem:[%s4 + $0x64] sm:$0xf]
          %v1248 = vld [vmem:[%s4 + $0x68] sm:$0xf]
          %v1249 = vld [vmem:[%s4 + $0x6c] sm:$0xf]
          %v1250 = vld [vmem:[%s4 + $0x70] sm:$0xf]
          %v1251 = vld [vmem:[%s4 + $0x74] sm:$0xf]
          %v1252 = vld [vmem:[%s4 + $0x78] sm:$0xf]
          %v1253 = vld [vmem:[%s4 + $0x7c] sm:$0xf]
          %v1254 = vld [vmem:[%s4 + $0x80] sm:$0xf]
          %v1255 = vld [vmem:[%s4 + $0x84] sm:$0xf]
          %v1256 = vld [vmem:[%s4 + $0x88] sm:$0xf]
          %v1257 = vld [vmem:[%s4 + $0x8c] sm:$0xf]
          %v1258 = vld [vmem:[%s4 + $0x90] sm:$0xf]
          %v1259 = vld [vmem:[%s4 + $0x94] sm:$0xf]
          %v1260 = vld [vmem:[%s4 + $0x98] sm:$0xf]
          %v1261 = vld [vmem:[%s4 + $0x9c] sm:$0xf]
          %v1262 = vld [vmem:[%s4 + $0xa0] sm:$0xf]
          %v1263 = vld [vmem:[%s4 + $0xa4] sm:$0xf]
          %v1264 = vld [vmem:[%s4 + $0xa8] sm:$0xf]
          %v1265 = vld [vmem:[%s4 + $0xac] sm:$0xf]
          %v1266 = vld [vmem:[%s4 + $0xb0] sm:$0xf]
          %v1267 = vld [vmem:[%s4 + $0xb4] sm:$0xf]
          %v1268 = vld [vmem:[%s4 + $0xb8] sm:$0xf]
          %v1269 = vld [vmem:[%s4 + $0xbc] sm:$0xf]
          %v1270 = vld [vmem:[%s4 + $0xc0] sm:$0xf]
          %v1271 = vld [vmem:[%s4 + $0xc4] sm:$0xf]
          %v1272 = vld [vmem:[%s4 + $0xc8] sm:$0xf]
          %v1273 = vld [vmem:[%s4 + $0xcc] sm:$0xf]
          %v1274 = vld [vmem:[%s4 + $0xd0] sm:$0xf]
          %v1275 = vld [vmem:[%s4 + $0xd4] sm:$0xf]
          %v1276 = vld [vmem:[%s4 + $0xd8] sm:$0xf]
          %v1277 = vld [vmem:[%s4 + $0xdc] sm:$0xf]
          %v1278 = vld [vmem:[%s4 + $0xe0] sm:$0xf]
          %v1279 = vld [vmem:[%s4 + $0xe4] sm:$0xf]
          %v1280 = vld [vmem:[%s4 + $0xe8] sm:$0xf]
          %v1281 = vld [vmem:[%s4 + $0xec] sm:$0xf]
          %v1282 = vld [vmem:[%s4 + $0xf0] sm:$0xf]
          %v1283 = vld [vmem:[%s4 + $0xf4] sm:$0xf]
          %v1284 = vld [vmem:[%s4 + $0xf8] sm:$0xf]
          %v1285 = vld [vmem:[%s4 + $0xfc] sm:$0xf]
          %v1286 = vld [vmem:[%s5] sm:$0x1]
          %v1288 = vlaneseq
          %v1289 = vshrl.u32 %v1288, 7
          %v1290 = vsub.s32 0, %v1289
          %v1291 = vrot.slane %v1286, %v1290
          %v1357 = vunpack.c.l.b16 %v1222
          %v1358 = vunpack.c.l.b16 %v1223
          %v1359 = vunpack.c.l.b16 %v1224
          %v1360 = vunpack.c.l.b16 %v1225
          %v1361 = vunpack.c.l.b16 %v1226
          %v1362 = vunpack.c.l.b16 %v1227
          %v1363 = vunpack.c.l.b16 %v1228
          %v1364 = vunpack.c.l.b16 %v1229
          %v1365 = vunpack.c.l.b16 %v1230
          %v1366 = vunpack.c.l.b16 %v1231
          %v1367 = vunpack.c.l.b16 %v1232
          %v1368 = vunpack.c.l.b16 %v1233
          %v1369 = vunpack.c.l.b16 %v1234
          %v1370 = vunpack.c.l.b16 %v1235
          %v1371 = vunpack.c.l.b16 %v1236
          %v1372 = vunpack.c.l.b16 %v1237
          %v1373 = vunpack.c.l.b16 %v1238
          %v1374 = vunpack.c.l.b16 %v1239
          %v1375 = vunpack.c.l.b16 %v1240
          %v1376 = vunpack.c.l.b16 %v1241
          %v1377 = vunpack.c.l.b16 %v1242
          %v1378 = vunpack.c.l.b16 %v1243
          %v1379 = vunpack.c.l.b16 %v1244
          %v1380 = vunpack.c.l.b16 %v1245
          %v1381 = vunpack.c.l.b16 %v1246
          %v1382 = vunpack.c.l.b16 %v1247
          %v1383 = vunpack.c.l.b16 %v1248
          %v1384 = vunpack.c.l.b16 %v1249
          %v1385 = vunpack.c.l.b16 %v1250
          %v1386 = vunpack.c.l.b16 %v1251
          %v1387 = vunpack.c.l.b16 %v1252
          %v1388 = vunpack.c.l.b16 %v1253
          %v1389 = vunpack.c.l.b16 %v1254
          %v1390 = vunpack.c.l.b16 %v1255
          %v1391 = vunpack.c.l.b16 %v1256
          %v1392 = vunpack.c.l.b16 %v1257
          %v1393 = vunpack.c.l.b16 %v1258
          %v1394 = vunpack.c.l.b16 %v1259
          %v1395 = vunpack.c.l.b16 %v1260
          %v1396 = vunpack.c.l.b16 %v1261
          %v1397 = vunpack.c.l.b16 %v1262
          %v1398 = vunpack.c.l.b16 %v1263
          %v1399 = vunpack.c.l.b16 %v1264
          %v1400 = vunpack.c.l.b16 %v1265
          %v1401 = vunpack.c.l.b16 %v1266
          %v1402 = vunpack.c.l.b16 %v1267
          %v1403 = vunpack.c.l.b16 %v1268
          %v1404 = vunpack.c.l.b16 %v1269
          %v1405 = vunpack.c.l.b16 %v1270
          %v1406 = vunpack.c.l.b16 %v1271
          %v1407 = vunpack.c.l.b16 %v1272
          %v1408 = vunpack.c.l.b16 %v1273
          %v1409 = vunpack.c.l.b16 %v1274
          %v1410 = vunpack.c.l.b16 %v1275
          %v1411 = vunpack.c.l.b16 %v1276
          %v1412 = vunpack.c.l.b16 %v1277
          %v1413 = vunpack.c.l.b16 %v1278
          %v1414 = vunpack.c.l.b16 %v1279
          %v1415 = vunpack.c.l.b16 %v1280
          %v1416 = vunpack.c.l.b16 %v1281
          %v1417 = vunpack.c.l.b16 %v1282
          %v1418 = vunpack.c.l.b16 %v1283
          %v1419 = vunpack.c.l.b16 %v1284
          %v1420 = vunpack.c.l.b16 %v1285
          %v1421 = vpack.c.b16 %v1358, %v1357
          %v1422 = vpack.c.b16 %v1360, %v1359
          %v1423 = vpack.c.b16 %v1362, %v1361
          %v1424 = vpack.c.b16 %v1364, %v1363
          %v1425 = vpack.c.b16 %v1366, %v1365
          %v1426 = vpack.c.b16 %v1368, %v1367
          %v1427 = vpack.c.b16 %v1370, %v1369
          %v1428 = vpack.c.b16 %v1372, %v1371
          %v1429 = vpack.c.b16 %v1374, %v1373
          %v1430 = vpack.c.b16 %v1376, %v1375
          %v1431 = vpack.c.b16 %v1378, %v1377
          %v1432 = vpack.c.b16 %v1380, %v1379
          %v1433 = vpack.c.b16 %v1382, %v1381
          %v1434 = vpack.c.b16 %v1384, %v1383
          %v1435 = vpack.c.b16 %v1386, %v1385
          %v1436 = vpack.c.b16 %v1388, %v1387
          %v1437 = vpack.c.b16 %v1390, %v1389
          %v1438 = vpack.c.b16 %v1392, %v1391
          %v1439 = vpack.c.b16 %v1394, %v1393
          %v1440 = vpack.c.b16 %v1396, %v1395
          %v1441 = vpack.c.b16 %v1398, %v1397
          %v1442 = vpack.c.b16 %v1400, %v1399
          %v1443 = vpack.c.b16 %v1402, %v1401
          %v1444 = vpack.c.b16 %v1404, %v1403
          %v1445 = vpack.c.b16 %v1406, %v1405
          %v1446 = vpack.c.b16 %v1408, %v1407
          %v1447 = vpack.c.b16 %v1410, %v1409
          %v1448 = vpack.c.b16 %v1412, %v1411
          %v1449 = vpack.c.b16 %v1414, %v1413
          %v1450 = vpack.c.b16 %v1416, %v1415
          %v1451 = vpack.c.b16 %v1418, %v1417
          %v1452 = vpack.c.b16 %v1420, %v1419
          %1485 = vmatprep.subr.bf16.mxu0 0
          %1486 = vmatpush1.bf16.msra.mxu0 %v1421
          %1487 = vmatprep.subr.bf16.mxu0 0
          %1488 = vmatpush1.bf16.msra.mxu0 %v1422
          %1489 = vmatprep.subr.bf16.mxu0 0
          %1490 = vmatpush1.bf16.msra.mxu0 %v1423
          %1491 = vmatprep.subr.bf16.mxu0 0
          %1492 = vmatpush1.bf16.msra.mxu0 %v1424
          %1493 = vmatprep.subr.bf16.mxu0 0
          %1494 = vmatpush1.bf16.msra.mxu0 %v1425
          %1495 = vmatprep.subr.bf16.mxu0 0
          %1496 = vmatpush1.bf16.msra.mxu0 %v1426
          %1497 = vmatprep.subr.bf16.mxu0 0
          %1498 = vmatpush1.bf16.msra.mxu0 %v1427
          %1499 = vmatprep.subr.bf16.mxu0 0
          %1500 = vmatpush1.bf16.msra.mxu0 %v1428
          %1501 = vmatprep.subr.bf16.mxu0 0
          %1502 = vmatpush1.bf16.msra.mxu0 %v1429
          %1503 = vmatprep.subr.bf16.mxu0 0
          %1504 = vmatpush1.bf16.msra.mxu0 %v1430
          %1505 = vmatprep.subr.bf16.mxu0 0
          %1506 = vmatpush1.bf16.msra.mxu0 %v1431
          %1507 = vmatprep.subr.bf16.mxu0 0
          %1508 = vmatpush1.bf16.msra.mxu0 %v1432
          %1509 = vmatprep.subr.bf16.mxu0 0
          %1510 = vmatpush1.bf16.msra.mxu0 %v1433
          %1511 = vmatprep.subr.bf16.mxu0 0
          %1512 = vmatpush1.bf16.msra.mxu0 %v1434
          %1513 = vmatprep.subr.bf16.mxu0 0
          %1514 = vmatpush1.bf16.msra.mxu0 %v1435
          %1515 = vmatprep.subr.bf16.mxu0 0
          %1516 = vmatpush1.bf16.msra.mxu0 %v1436
          %1517 = vmatprep.mubr.bf16.mxu0 %v1219
          %1518 = vmatmul.mubr.bf16.gmra.mrb[0].mxu0 %v1218
          %v1519 = vpop.f32.mrb[0].mxu0
          %v1520 = vadd.f32 %v1291, %v1519
          %v1521 = vpop.f32.mrb[0].mxu0
          %v1522 = vpop.f32.mrb[0].mxu0
          %v1523 = vadd.f32 %v1291, %v1522
          %v1524 = vpop.f32.mrb[0].mxu0
          %1525 = vdwg.mxu0
          %1526 = vmatprep.subr.bf16.mxu0 0
          %1527 = vmatpush1.bf16.msra.mxu0 %v1437
          %1528 = vmatprep.subr.bf16.mxu0 0
          %1529 = vmatpush1.bf16.msra.mxu0 %v1438
          %1530 = vmatprep.subr.bf16.mxu0 0
          %1531 = vmatpush1.bf16.msra.mxu0 %v1439
          %1532 = vmatprep.subr.bf16.mxu0 0
          %1533 = vmatpush1.bf16.msra.mxu0 %v1440
          %1534 = vmatprep.subr.bf16.mxu0 0
          %1535 = vmatpush1.bf16.msra.mxu0 %v1441
          %1536 = vmatprep.subr.bf16.mxu0 0
          %1537 = vmatpush1.bf16.msra.mxu0 %v1442
          %1538 = vmatprep.subr.bf16.mxu0 0
          %1539 = vmatpush1.bf16.msra.mxu0 %v1443
          %1540 = vmatprep.subr.bf16.mxu0 0
          %1541 = vmatpush1.bf16.msra.mxu0 %v1444
          %1542 = vmatprep.subr.bf16.mxu0 0
          %1543 = vmatpush1.bf16.msra.mxu0 %v1445
          %1544 = vmatprep.subr.bf16.mxu0 0
          %1545 = vmatpush1.bf16.msra.mxu0 %v1446
          %1546 = vmatprep.subr.bf16.mxu0 0
          %1547 = vmatpush1.bf16.msra.mxu0 %v1447
          %1548 = vmatprep.subr.bf16.mxu0 0
          %1549 = vmatpush1.bf16.msra.mxu0 %v1448
          %1550 = vmatprep.subr.bf16.mxu0 0
          %1551 = vmatpush1.bf16.msra.mxu0 %v1449
          %1552 = vmatprep.subr.bf16.mxu0 0
          %1553 = vmatpush1.bf16.msra.mxu0 %v1450
          %1554 = vmatprep.subr.bf16.mxu0 0
          %1555 = vmatpush1.bf16.msra.mxu0 %v1451
          %1556 = vmatprep.subr.bf16.mxu0 0
          %1557 = vmatpush1.bf16.msra.mxu0 %v1452
          %1558 = vmatprep.mubr.bf16.mxu0 %v1221
          %1559 = vmatmul.mubr.bf16.gmra.mrb[0].mxu0 %v1220
          %v1560 = vpop.f32.mrb[0].mxu0
          %v1561 = vadd.f32 %v1520, %v1560
          %v1562 = vpop.f32.mrb[0].mxu0
          %v1563 = vpop.f32.mrb[0].mxu0
          %v1564 = vadd.f32 %v1523, %v1563
          %v1565 = vpop.f32.mrb[0].mxu0
          %1566 = vdwg.mxu0
          %1569 = vrot.lane.b32.xlu0 %v1561, 127
          %v1570 = vpop.permute.xlu0 %1569
          %1571 = vrot.lane.b32.xlu0 %v1564, 127
          %v1572 = vpop.permute.xlu0 %1571
          %v1575 = vmax.f32 %v1561, %v1570
          %v1576 = vmax.f32 %v1564, %v1572
          %v1577 = vsub.f32 %v1561, %v1570
          %v1578 = vsub.f32 %v1564, %v1572
          %v1579 = vand.u32 2147483647, %v1577
          %v1580 = vand.u32 2147483647, %v1578
          %v1581 = vsub.f32 0.0, %v1579
          %v1582 = vsub.f32 0.0, %v1580
          %v1583 = vmul.f32 %v1581, 1.442695
          %v1584 = vpow.pop %v1583
          %v1585 = vmul.f32 %v1582, 1.442695
          %v1586 = vpow.pop %v1585
          %v1587 = vadd.f32 %v1584, 1.0
          %v1588 = vadd.f32 %v1586, 1.0
          %v1589 = vlog2.pop %v1587
          %v1590 = vmul.f32 %v1589, 0.6931472
          %v1591 = vlog2.pop %v1588
          %v1592 = vmul.f32 %v1591, 0.6931472
          %v1593 = vadd.f32 %v1575, %v1590
          %v1594 = vadd.f32 %v1576, %v1592
          %1596 = vset.pattern.permute.xlu0 0
          %1597 = vperm.xlu0 %1596, %v1593
          %v1598 = vpop.permute.xlu0 %1597
          %1601 = vset.pattern.permute.xlu0 0
          %1602 = vperm.xlu0 %1601, %v1594
          %v1603 = vpop.permute.xlu0 %1602
          %v1605 = vsub.f32 %v1561, %v1598
          %v1606 = vsub.f32 %v1564, %v1603
          %vm1607 = vcmask 15360
          %1608 = vst.msk [vmem:[%s291] sm:$0xff] %vm1607, %v1605
          %1609 = vst.msk [vmem:[%s291 + $0x8] sm:$0xff] %vm1607, %v1606
        $region68: #{tpu_custom_call.1} parent=43 // pred_fallthru
          _
        %s1610 = sand.u32 %s175, 1
        %s1611 = sand.u32 %s175, 1
        %s1612 = smul.addr %s1611, 16
        %s1613 = scalar_lea.vmem [#allocation9], %s1612
        // Predicated region
        $region73: #{tpu_custom_call.1} parent=43 // pred_check
          %p1614 = pneg %p185
        $region74: #{tpu_custom_call.1} parent=43 // pred_check_branch
          %1616 = sbr.rel (%p1614) target = $region76
        $region75: #{tpu_custom_call.1} parent=43 // pred_region
          %s1617 = smul.u32 %s23, %s22
          %s1618 = smul.u32 2, %s1617
          %s1619 = ssub.s32 1, %s1618
          %s1620 = smul.u32 128, %s1619
          %p1621 = scmp.ne.s32.totalorder 0, %s1620
          %s1622 = smul.addr %s1618, 8
          %s1623 = scalar_lea.vmem %s6, %s1622
          // Predicated region
          $region77: #{tpu_custom_call.1} parent=75 // pred_check
            %p1624 = pneg %p1621
          $region78: #{tpu_custom_call.1} parent=75 // pred_check_branch
            %1626 = sbr.rel (%p1624) target = $region80
          $region79: #{tpu_custom_call.1} parent=75 // pred_region
            // Predicated region
            $region81: #{tpu_custom_call.1} parent=79 // pred_check
              _
            $region82: #{tpu_custom_call.1} parent=79 // pred_check_branch
              %1628 = sbr.rel (0) target = $region84
            $region83: #{tpu_custom_call.1} parent=79 // pred_region
              // Predicated region
              $region96: #{tpu_custom_call.1} parent=83 // pred_check
                _
              $region97: #{tpu_custom_call.1} parent=83 // pred_check_branch
                %1651 = sbr.rel (0) target = $region99
              $region98: #{tpu_custom_call.1} parent=83 // pred_region
                // While loop
                $region100: #{tpu_custom_call.1} parent=98 // loop_pre_header
                  _
                $region101: #{tpu_custom_call.1} parent=98 // loop_header
                  %s1653 = sphi 0, %s1655
                  %p1654 = scmp.ge.s32.totalorder %s1653, %s1619
                  %s1658 = sphi 0, %s1665
                  %s1659 = sphi %s1613, %s1668
                  %s1660 = sphi %s1623, %s1669
                $region102: #{tpu_custom_call.1} parent=98 // loop_header_branch
                  %1657 = sbr.rel (%p1654) target = $region106
                $region103: #{tpu_custom_call.1} parent=98 // loop_body
                  %v1661 = vld [vmem:[%s1659] sm:$0xff]
                  %1662 = vst [vmem:[%s1660] sm:$0xff] %v1661
                  %s1663 = sadd.s32 1, %s1658
                  %p1664 = scmp.ge.s32.totalorder %s1663, %s1619
                  %s1665 = scalar_select %p1664, 0, %s1663
                  %s1666 = smul.u32 %s1665, 8
                  %s1667 = smul.u32 %s1665, 8
                  %s1668 = scalar_lea.vmem %s1613, %s1666 [#allocation9]
                  %s1669 = scalar_lea.vmem %s1623, %s1667
                $region104: #{tpu_custom_call.1} parent=98 // loop_footer
                  %s1655 = sadd.s32 %s1653, 1
                $region105: #{tpu_custom_call.1} parent=98 // loop_footer_branch
                  %1652 = sbr.rel target = $region101
                $region106: #{tpu_custom_call.1} parent=98 // loop_exit
                  _
              $region99: #{tpu_custom_call.1} parent=83 // pred_fallthru
                _
              // Predicated region
              $region107: #{tpu_custom_call.1} parent=83 // pred_check
                _
              $region108: #{tpu_custom_call.1} parent=83 // pred_check_branch
                %1671 = sbr.rel target = $region110
              $region109: #{tpu_custom_call.1} parent=83 // pred_region
                _
              $region110: #{tpu_custom_call.1} parent=83 // pred_fallthru
                _
            $region84: #{tpu_custom_call.1} parent=79 // pred_fallthru
              _
            // Predicated region
            $region85: #{tpu_custom_call.1} parent=79 // pred_check
              _
            $region86: #{tpu_custom_call.1} parent=79 // pred_check_branch
              %1630 = sbr.rel target = $region88
            $region87: #{tpu_custom_call.1} parent=79 // pred_region
              // While loop
              $region89: #{tpu_custom_call.1} parent=87 // loop_pre_header
                _
              $region90: #{tpu_custom_call.1} parent=87 // loop_header
                %s1633 = sphi 0, %s1635
                %p1634 = scmp.ge.s32.totalorder %s1633, %s1619
                %s1638 = sphi 0, %s1645
                %s1639 = sphi %s1613, %s1648
                %s1640 = sphi %s1623, %s1649
              $region91: #{tpu_custom_call.1} parent=87 // loop_header_branch
                %1637 = sbr.rel (%p1634) target = $region95
              $region92: #{tpu_custom_call.1} parent=87 // loop_body
                %v1641 = vld [vmem:[%s1639] sm:$0xff]
                %1642 = vst [vmem:[%s1640] sm:$0xff] %v1641
                %s1643 = sadd.s32 1, %s1638
                %p1644 = scmp.ge.s32.totalorder %s1643, %s1619
                %s1645 = scalar_select %p1644, 0, %s1643
                %s1646 = smul.u32 %s1645, 8
                %s1647 = smul.u32 %s1645, 8
                %s1648 = scalar_lea.vmem %s1613, %s1646 [#allocation9]
                %s1649 = scalar_lea.vmem %s1623, %s1647
              $region93: #{tpu_custom_call.1} parent=87 // loop_footer
                %s1635 = sadd.s32 %s1633, 1
              $region94: #{tpu_custom_call.1} parent=87 // loop_footer_branch
                %1632 = sbr.rel target = $region90
              $region95: #{tpu_custom_call.1} parent=87 // loop_exit
                _
            $region88: #{tpu_custom_call.1} parent=79 // pred_fallthru
              _
          $region80: #{tpu_custom_call.1} parent=75 // pred_fallthru
            _
          %1672 = vnop
        $region76: #{tpu_custom_call.1} parent=43 // pred_fallthru
          _
      $region44: #{tpu_custom_call.1} parent=5 // pred_fallthru
        _
      %p1673 = scmp.le.s32.totalorder 2, %s13
      // Predicated region
      $region111: #{tpu_custom_call.1} parent=5 // pred_check
        %p1674 = pneg %p1673
      $region112: #{tpu_custom_call.1} parent=5 // pred_check_branch
        %1676 = sbr.rel (%p1674) target = $region114
      $region113: #{tpu_custom_call.1} parent=5 // pred_region
        %s1677 = ssub.s32 %s13, 2
        // Predicated region
        $region115: #{tpu_custom_call.1} parent=113 // pred_check
          %p1678 = pneg %p191
        $region116: #{tpu_custom_call.1} parent=113 // pred_check_branch
          %1680 = sbr.rel (%p1678) target = $region118
        $region117: #{tpu_custom_call.1} parent=113 // pred_region
          %s1681 = sand.u32 %s176, 1
          %s1682 = sand.u32 %s176, 1
          %s1683 = smul.addr %s1682, 16
          %s1684 = scalar_lea.vmem [#allocation9], %s1683
        $region118: #{tpu_custom_call.1} parent=113 // pred_fallthru
          _
      $region114: #{tpu_custom_call.1} parent=5 // pred_fallthru
        _
    $region6: #{tpu_custom_call.1} parent=1 // loop_footer
      %s17 = sadd.s32 1, %s13
    $region7: #{tpu_custom_call.1} parent=1 // loop_footer_branch
      %12 = sbr.rel target = $region3
    $region8: #{tpu_custom_call.1} parent=1 // loop_exit
      _
    %1685 = vsyncpa [#allocation8], 1
    %s1686 = scalar_lea.sflag [#allocation8], 1
    %1687 = vsyncpa %s1686, 1

</llo_original>
